<compile_context>
chip_gen: v6e
topology: v6e:2x2x1
jax: 0.10.0
libtpu: 0.0.40
codegen_flags: <defaults>
</compile_context>

<pallas_src>
import functools

import jax
import jax.numpy as jnp
import numpy as np
from jax.experimental import pallas as pl
from jax.experimental.pallas import tpu as pltpu

LANE = 128            # lane width (last dim)
SUBLANE = 8           # f32 sublane packing (second-to-last dim)


def _vmem_limit_bytes():
    # Generation-aware scoped-VMEM budget: ~70% of per-core physical VMEM
    # (v5e/v6e: 128 MiB -> ~90 MiB, v7x: 64 MiB -> ~45 MiB). Fallback is safe everywhere.
    try:
        cap = pltpu.get_tpu_info().vmem_capacity_bytes
    except Exception:
        cap = 64 * 1024 * 1024
    return int(min(cap * 7 // 10, 96 * 1024 * 1024))


VMEM_LIMIT = _vmem_limit_bytes()


def round_up(x, m):
    return (x + m - 1) // m * m


def _pick_div(dim, cap, step):
    """Largest multiple of `step` <= cap that divides `dim` (dim is a multiple of step)."""
    if dim <= cap:
        return dim
    c = (cap // step) * step
    while c > step:
        if dim % c == 0:
            return c
        c -= step
    return step


# -----------------------------------------------------------------------------
# Tiled matmul + bias kernel:  (M, K)bf16 @ (K, N)bf16 + b(1, N)f32 -> (M, N)f32.
# Used for both the hoisted input projection (x @ W_ih^T + bias) and the FC/vocab head.
# -----------------------------------------------------------------------------
def _matmul_bias_kernel(x_ref, w_ref, b_ref, o_ref, acc_ref):
    @pl.when(pl.program_id(2) == 0)
    def _():
        # initialize accumulator with the (broadcast) bias -> bias add is free filler.
        # NOTE: padded M rows also receive the bias; they are independent rows and are
        # sliced off / ignored by every consumer, so this is harmless by construction.
        acc_ref[...] = jnp.broadcast_to(b_ref[...].astype(jnp.float32), acc_ref.shape)

    acc_ref[...] += jnp.dot(x_ref[...], w_ref[...],
                            preferred_element_type=jnp.float32)

    @pl.when(pl.program_id(2) == pl.num_programs(2) - 1)
    def _():
        o_ref[...] = acc_ref[...].astype(o_ref.dtype)


def matmul_bias_pallas(x, w_t, b):
    """x:(M,K) @ w_t:(K,N) + b:(1,N) -> (M,N) f32.  K, N pre-padded to multiples of 128."""
    M, K = x.shape
    Kw, N = w_t.shape
    assert K == Kw and K % LANE == 0 and N % LANE == 0

    x = x.astype(jnp.bfloat16)
    w_t = w_t.astype(jnp.bfloat16)
    b = b.astype(jnp.float32)

    M8 = round_up(M, SUBLANE)
    if M8 != M:
        x = jnp.pad(x, ((0, M8 - M), (0, 0)))
    tm = _pick_div(M8, 512, SUBLANE)    # divisor of M8 -> no extra pad/slice when M%8==0
    tk = _pick_div(K, 512, LANE)
    tn = _pick_div(N, 1024, LANE)

    out = pl.pallas_call(
        _matmul_bias_kernel,
        out_shape=jax.ShapeDtypeStruct((M8, N), jnp.float32),
        grid_spec=pltpu.PrefetchScalarGridSpec(
            num_scalar_prefetch=0,
            grid=(M8 // tm, N // tn, K // tk),
            in_specs=[
                pl.BlockSpec((tm, tk), lambda i, j, k: (i, k)),
                pl.BlockSpec((tk, tn), lambda i, j, k: (k, j)),
                pl.BlockSpec((1, tn), lambda i, j, k: (0, j)),
            ],
            out_specs=pl.BlockSpec((tm, tn), lambda i, j, k: (i, j)),
            scratch_shapes=[pltpu.VMEM((tm, tn), jnp.float32)],
        ),
        compiler_params=pltpu.CompilerParams(
            dimension_semantics=("parallel", "parallel", "arbitrary"),
            vmem_limit_bytes=VMEM_LIMIT),
    )(x, w_t, b)
    return out if M8 == M else out[:M]


# -----------------------------------------------------------------------------
# RNN recurrence kernel (input projection already hoisted out):
#   h_t = tanh(XW[t] + h_{t-1} @ W_hh^T)
# Grid: (batch-split [parallel], time-chunks [arbitrary]).  The hidden state lives in a
# VMEM scratch accumulator across the time axis; within a chunk a (partially) unrolled
# fori_loop carries h in vregs.  The per-step matmul uses bf16 operands, f32 accumulate.
# -----------------------------------------------------------------------------
def _rnn_chunk_kernel(xw_ref, h0_ref, whh_ref, out_ref, hlast_ref, h_scr,
                      *, t_real, tc):
    c = pl.program_id(1)

    @pl.when(c == 0)
    def _():
        h_scr[...] = h0_ref[...]

    whh = whh_ref[...]                       # hoisted: one load per grid step (bf16)
    needs_mask = (t_real % tc) != 0          # static: only mask if T was padded

    def step(i, h):
        h_new = jnp.tanh(
            xw_ref[i]
            + jnp.dot(h.astype(whh.dtype), whh, preferred_element_type=jnp.float32))
        if needs_mask:
            valid = (c * tc + i) < t_real
            h_new = jnp.where(valid, h_new, h)   # padded timesteps do not update h
        out_ref[i] = h_new.astype(out_ref.dtype)
        return h_new

    h_final = jax.lax.fori_loop(0, tc, step, h_scr[...], unroll=min(tc, 16))
    h_scr[...] = h_final

    # NOTE: hlast has a block index that is constant along the time axis, so it stays
    # VMEM-resident across all time chunks and is written back to HBM once per batch
    # block.  Writing only on the last time chunk is intentional and relies on that
    # semantics; it would silently break if the time axis were re-tiled or marked parallel.
    @pl.when(c == pl.num_programs(1) - 1)
    def _():
        hlast_ref[...] = h_final


def rnn_recurrence_pallas(xw, h0, whh_t, *, t_real, tc):
    Tp, Bp, Hp = xw.shape
    nb = 2 if (Bp >= 16 and Bp % 16 == 0) else 1   # v7x: give the 2nd TC a batch shard
    Bb = Bp // nb
    kernel = functools.partial(_rnn_chunk_kernel, t_real=t_real, tc=tc)
    out, h_last = pl.pallas_call(
        kernel,
        out_shape=(jax.ShapeDtypeStruct((Tp, Bp, Hp), jnp.bfloat16),
                   jax.ShapeDtypeStruct((Bp, Hp), jnp.float32)),
        grid_spec=pltpu.PrefetchScalarGridSpec(
            num_scalar_prefetch=0,
            grid=(nb, Tp // tc),
            in_specs=[
                pl.BlockSpec((tc, Bb, Hp), lambda b, c: (c, b, 0)),   # XW chunk (f32)
                pl.BlockSpec((Bb, Hp), lambda b, c: (b, 0)),          # h0 (resident)
                pl.BlockSpec((Hp, Hp), lambda b, c: (0, 0)),          # W_hh^T (resident, bf16)
            ],
            out_specs=[
                pl.BlockSpec((tc, Bb, Hp), lambda b, c: (c, b, 0)),   # per-chunk outputs (bf16)
                pl.BlockSpec((Bb, Hp), lambda b, c: (b, 0)),          # final hidden (f32)
            ],
            scratch_shapes=[pltpu.VMEM((Bb, Hp), jnp.float32)],
        ),
        compiler_params=pltpu.CompilerParams(
            dimension_semantics=("parallel", "arbitrary"),   # time is a true recurrence
            vmem_limit_bytes=VMEM_LIMIT),
    )(xw, h0, whh_t)
    return out, h_last


# -----------------------------------------------------------------------------
# Parameter init (PyTorch layout) and one-time packing (transpose + pad + bf16 cast).
# -----------------------------------------------------------------------------
def init_params(key, vocab_size, embedding_dim, hidden_dim, num_layers):
    keys = jax.random.split(key, 3 + 4 * num_layers)
    params = {}
    params["embedding"] = jax.random.normal(
        keys[0], (vocab_size, embedding_dim), jnp.float32)
    bound = 1.0 / np.sqrt(hidden_dim)
    layers = []
    for l in range(num_layers):
        in_dim = embedding_dim if l == 0 else hidden_dim
        k = keys[3 + 4 * l: 3 + 4 * (l + 1)]
        wih = jax.random.uniform(k[0], (hidden_dim, in_dim), jnp.float32, -bound, bound)
        whh = jax.random.uniform(k[1], (hidden_dim, hidden_dim), jnp.float32, -bound, bound)
        bih = jax.random.uniform(k[2], (hidden_dim,), jnp.float32, -bound, bound)
        bhh = jax.random.uniform(k[3], (hidden_dim,), jnp.float32, -bound, bound)
        layers.append({"wih": wih, "whh": whh, "bih": bih, "bhh": bhh})
    params["rnn"] = layers
    fb = 1.0 / np.sqrt(hidden_dim)
    params["fc_w"] = jax.random.uniform(keys[1], (vocab_size, hidden_dim), jnp.float32, -fb, fb)
    params["fc_b"] = jax.random.uniform(keys[2], (vocab_size,), jnp.float32, -fb, fb)
    return params


def pack_params(params):
    """Pre-transpose, pad and bf16-cast weights once (no per-forward transposes/pads)."""
    V, E = params["embedding"].shape
    H = params["rnn"][0]["whh"].shape[0]
    Ep, Hp, Vp = round_up(E, LANE), round_up(H, LANE), round_up(V, LANE)

    emb = jnp.zeros((V, Ep), jnp.float32).at[:, :E].set(
        params["embedding"]).astype(jnp.bfloat16)
    layers = []
    for l, p in enumerate(params["rnn"]):
        in_dim = E if l == 0 else H
        in_p = Ep if l == 0 else Hp
        wih_t = jnp.zeros((in_p, Hp), jnp.float32).at[:in_dim, :H].set(
            p["wih"].T).astype(jnp.bfloat16)
        whh_t = jnp.zeros((Hp, Hp), jnp.float32).at[:H, :H].set(
            p["whh"].T).astype(jnp.bfloat16)
        bias = jnp.zeros((1, Hp), jnp.float32).at[0, :H].set(p["bih"] + p["bhh"])
        layers.append({"wih_t": wih_t, "whh_t": whh_t, "bias": bias})
    fc_w_t = jnp.zeros((Hp, Vp), jnp.float32).at[:H, :V].set(
        params["fc_w"].T).astype(jnp.bfloat16)
    fc_b = jnp.zeros((1, Vp), jnp.float32).at[0, :V].set(params["fc_b"])

    packed = {"embedding": emb, "rnn": layers, "fc_w_t": fc_w_t, "fc_b": fc_b}
    dims = (V, E, H, Ep, Hp, Vp)   # static metadata
    return packed, dims


# -----------------------------------------------------------------------------
# Full model forward (matches RNNLanguageModel.forward in eval mode)
# -----------------------------------------------------------------------------
@functools.partial(jax.jit, static_argnames=("dims",))
def rnn_language_model_forward(packed, x_tokens, hidden, *, dims):
    V, _E, H, _Ep, Hp, Vp = dims
    B, T = x_tokens.shape
    L = len(packed["rnn"])
    Bp = round_up(B, SUBLANE)
    TC = min(T, 64)                   # timesteps per grid step (amortizes grid overhead)
    Tp = round_up(T, TC)

    # Embedding lookup, gathered directly time-major (B,T)->(T,B,Ep); bf16 table halves
    # the gather traffic.  Hot path is the Pallas matmul/RNN kernels below.
    emb = jnp.take(packed["embedding"], x_tokens.T, axis=0)        # (T, B, Ep) bf16
    x_tbe = jnp.pad(emb, ((0, Tp - T), (0, Bp - B), (0, 0)))       # (Tp, Bp, Ep)

    hidden_p = jnp.pad(hidden, ((0, 0), (0, Bp - B), (0, Hp - H)))  # (L, Bp, Hp) f32

    layer_in = x_tbe
    new_hidden = []
    for l in range(L):
        lp = packed["rnn"][l]
        K_in = layer_in.shape[-1]
        # Hoisted input projection + fused bias: one big lane-dense bf16 MXU matmul, f32 out.
        xw = matmul_bias_pallas(layer_in.reshape(Tp * Bp, K_in),
                                lp["wih_t"], lp["bias"])           # (Tp*Bp, Hp) f32
        xw = xw.reshape(Tp, Bp, Hp)
        # Serial recurrence: only h @ W_hh^T + tanh per step, TC steps per grid iteration.
        layer_out, h_last = rnn_recurrence_pallas(xw, hidden_p[l], lp["whh_t"],
                                                  t_real=T, tc=TC)
        new_hidden.append(h_last)
        layer_in = layer_out                                       # (Tp, Bp, Hp) bf16
    new_hidden = jnp.stack(new_hidden, axis=0)[:, :B, :H]          # (L, B, H) f32

    # Dropout == identity in eval mode.
    # Reorder to batch-major on the Hp-wide bf16 activations (cheaper than reordering
    # the Vp-wide logits after the FC).
    rnn_out = jnp.transpose(layer_in[:T, :B, :], (1, 0, 2))        # (B, T, Hp) bf16

    # Tiled FC / vocab projection (tm divides B*T when B*T % 8 == 0 -> no output copy).
    logits = matmul_bias_pallas(rnn_out.reshape(B * T, Hp),
                                packed["fc_w_t"], packed["fc_b"])  # (B*T, Vp) f32
    logits = logits.reshape(B, T, Vp)
    if Vp != V:
        logits = logits[:, :, :V]
    return logits, new_hidden


# Pure-JAX f32 reference (uses the raw PyTorch-layout params) for a sanity check.
def reference_forward(params, x_tokens, hidden):
    embedded = jnp.take(params["embedding"], x_tokens, axis=0)
    L = hidden.shape[0]
    layer_in = embedded
    new_hidden = []
    for l in range(L):
        p = params["rnn"][l]

        def step(h, x_t, p=p):
            h_new = jnp.tanh(x_t @ p["wih"].T + p["bih"] + h @ p["whh"].T + p["bhh"])
            return h_new, h_new

        h_last, outs = jax.lax.scan(step, hidden[l], jnp.transpose(layer_in, (1, 0, 2)))
        layer_in = jnp.transpose(outs, (1, 0, 2))
        new_hidden.append(h_last)
    logits = layer_in @ params["fc_w"].T + params["fc_b"]
    return logits, jnp.stack(new_hidden, axis=0)


if __name__ == "__main__":
    vocab_size, embedding_dim, hidden_dim, num_layers = 128, 32, 32, 2
    batch, seq = 2, 8

    key = jax.random.PRNGKey(0)
    k_param, k_tok = jax.random.split(key)
    params = init_params(k_param, vocab_size, embedding_dim, hidden_dim, num_layers)
    packed, dims = pack_params(params)

    x_tokens = jax.random.randint(k_tok, (batch, seq), 0, vocab_size, dtype=jnp.int32)
    hidden0 = jnp.zeros((num_layers, batch, hidden_dim), jnp.float32)  # init_hidden()

    logits, hidden_out = rnn_language_model_forward(packed, x_tokens, hidden0, dims=dims)
    logits = jax.block_until_ready(logits)
    hidden_out = jax.block_until_ready(hidden_out)

    ref_logits, ref_hidden = reference_forward(params, x_tokens, hidden0)
    # bf16 MXU operands -> slightly looser tolerance than a pure-f32 comparison.
    np.testing.assert_allclose(np.asarray(logits), np.asarray(ref_logits), atol=5e-2, rtol=5e-2)
    np.testing.assert_allclose(np.asarray(hidden_out), np.asarray(ref_hidden), atol=5e-2, rtol=5e-2)

    assert logits.shape == (batch, seq, vocab_size)
    assert hidden_out.shape == (num_layers, batch, hidden_dim)
    print("KERNEL_OK")
</pallas_src>

<mosaic_0001>
module attributes {stable_mosaic.version = 11 : i64} {
  func.func @_matmul_bias_kernel(%arg0: i32, %arg1: i32, %arg2: i32, %arg3: memref<64x128xbf16, #tpu.memory_space<vmem>>, %arg4: memref<128x128xbf16, #tpu.memory_space<vmem>>, %arg5: memref<1x128xf32, #tpu.memory_space<vmem>>, %arg6: memref<64x128xf32, #tpu.memory_space<vmem>>, %arg7: memref<64x128xf32, #tpu.memory_space<vmem>>) attributes {dimension_semantics = [#tpu.dimension_semantics<parallel>, #tpu.dimension_semantics<parallel>, #tpu.dimension_semantics<arbitrary>], iteration_bounds = array<i64: 1, 1, 1>, scalar_prefetch = 0 : i64, scratch_operands = 1 : i64, tpu.core_type = #tpu.core_type<tc>, window_params = [{transform_indices = @transform_0, window_bounds = array<i64: 64, 128>}, {transform_indices = @transform_1, window_bounds = array<i64: 128, 128>}, {transform_indices = @transform_2, window_bounds = array<i64: 1, 128>}, {transform_indices = @transform_3, window_bounds = array<i64: 64, 128>}]} {
    %c0_i32 = arith.constant 0 : i32
    %0 = arith.cmpi eq, %arg2, %c0_i32 : i32
    %1 = arith.extui %0 : i1 to i32
    %c0_i32_0 = arith.constant 0 : i32
    %2 = arith.cmpi ne, %1, %c0_i32_0 : i32
    scf.if %2 {
      %c0_10 = arith.constant 0 : index
      %c0_11 = arith.constant 0 : index
      %12 = vector.load %arg5[%c0_10, %c0_11] : memref<1x128xf32, #tpu.memory_space<vmem>>, vector<1x128xf32>
      %13 = vector.shape_cast %12 : vector<1x128xf32> to vector<1x128xf32>
      %14 = vector.broadcast %13 : vector<1x128xf32> to vector<64x128xf32>
      %c0_12 = arith.constant 0 : index
      %c0_13 = arith.constant 0 : index
      %15 = vector.load %arg7[%c0_12, %c0_13] : memref<64x128xf32, #tpu.memory_space<vmem>>, vector<64x128xf32>
      tpu.vector_store %arg7[%c0_12, %c0_13], %14 {strides = array<i32>} : memref<64x128xf32, #tpu.memory_space<vmem>>, vector<64x128xf32>,
    } else {
    }
    %c0 = arith.constant 0 : index
    %c0_1 = arith.constant 0 : index
    %3 = vector.load %arg7[%c0, %c0_1] : memref<64x128xf32, #tpu.memory_space<vmem>>, vector<64x128xf32>
    %c0_2 = arith.constant 0 : index
    %c0_3 = arith.constant 0 : index
    %4 = vector.load %arg3[%c0_2, %c0_3] : memref<64x128xbf16, #tpu.memory_space<vmem>>, vector<64x128xbf16>
    %c0_4 = arith.constant 0 : index
    %c0_5 = arith.constant 0 : index
    %5 = vector.load %arg4[%c0_4, %c0_5] : memref<128x128xbf16, #tpu.memory_space<vmem>>, vector<128x128xbf16>
    %cst = arith.constant dense<0.000000e+00> : vector<64x128xf32>
    %6 = tpu.matmul %4, %5, %cst {dimension_numbers = #tpu.dot_dimension_numbers<[1], [0], [0], [1], [0, 0, 1, 1], [], []>} : vector<64x128xbf16>, vector<128x128xbf16>, vector<64x128xf32> -> vector<64x128xf32>
    %7 = arith.addf %3, %6 : vector<64x128xf32>
    %c0_6 = arith.constant 0 : index
    %c0_7 = arith.constant 0 : index
    %8 = vector.load %arg7[%c0_6, %c0_7] : memref<64x128xf32, #tpu.memory_space<vmem>>, vector<64x128xf32>
    tpu.vector_store %arg7[%c0_6, %c0_7], %7 {strides = array<i32>} : memref<64x128xf32, #tpu.memory_space<vmem>>, vector<64x128xf32>,
    %c0_i32_8 = arith.constant 0 : i32
    %9 = arith.cmpi eq, %arg2, %c0_i32_8 : i32
    %10 = arith.extui %9 : i1 to i32
    %c0_i32_9 = arith.constant 0 : i32
    %11 = arith.cmpi ne, %10, %c0_i32_9 : i32
    scf.if %11 {
      %c0_10 = arith.constant 0 : index
      %c0_11 = arith.constant 0 : index
      %12 = vector.load %arg7[%c0_10, %c0_11] : memref<64x128xf32, #tpu.memory_space<vmem>>, vector<64x128xf32>
      %c0_12 = arith.constant 0 : index
      %c0_13 = arith.constant 0 : index
      %13 = vector.load %arg6[%c0_12, %c0_13] : memref<64x128xf32, #tpu.memory_space<vmem>>, vector<64x128xf32>
      tpu.vector_store %arg6[%c0_12, %c0_13], %12 {strides = array<i32>} : memref<64x128xf32, #tpu.memory_space<vmem>>, vector<64x128xf32>,
    } else {
    }
    return
  }
  func.func @transform_0(%arg0: i32, %arg1: i32, %arg2: i32) -> (i32, i32) {
    %c0_i32 = arith.constant 0 : i32
    return %arg0, %arg2 : i32, i32
  }
  func.func @transform_1(%arg0: i32, %arg1: i32, %arg2: i32) -> (i32, i32) {
    %c0_i32 = arith.constant 0 : i32
    return %arg2, %arg1 : i32, i32
  }
  func.func @transform_2(%arg0: i32, %arg1: i32, %arg2: i32) -> (i32, i32) {
    %c0_i32 = arith.constant 0 : i32
    %c0_i32_0 = arith.constant 0 : i32
    return %c0_i32, %arg1 : i32, i32
  }
  func.func @transform_3(%arg0: i32, %arg1: i32, %arg2: i32) -> (i32, i32) {
    %c0_i32 = arith.constant 0 : i32
    return %arg0, %arg1 : i32, i32
  }
}

module attributes {stable_mosaic.version = 11 : i64} {
  func.func @_matmul_bias_kernel(%arg0: i32, %arg1: i32, %arg2: i32, %arg3: memref<16x128xbf16, #tpu.memory_space<vmem>>, %arg4: memref<128x128xbf16, #tpu.memory_space<vmem>>, %arg5: memref<1x128xf32, #tpu.memory_space<vmem>>, %arg6: memref<16x128xf32, #tpu.memory_space<vmem>>, %arg7: memref<16x128xf32, #tpu.memory_space<vmem>>) attributes {dimension_semantics = [#tpu.dimension_semantics<parallel>, #tpu.dimension_semantics<parallel>, #tpu.dimension_semantics<arbitrary>], iteration_bounds = array<i64: 1, 1, 1>, scalar_prefetch = 0 : i64, scratch_operands = 1 : i64, tpu.core_type = #tpu.core_type<tc>, window_params = [{transform_indices = @transform_0, window_bounds = array<i64: 16, 128>}, {transform_indices = @transform_1, window_bounds = array<i64: 128, 128>}, {transform_indices = @transform_2, window_bounds = array<i64: 1, 128>}, {transform_indices = @transform_3, window_bounds = array<i64: 16, 128>}]} {
    %c0_i32 = arith.constant 0 : i32
    %0 = arith.cmpi eq, %arg2, %c0_i32 : i32
    %1 = arith.extui %0 : i1 to i32
    %c0_i32_0 = arith.constant 0 : i32
    %2 = arith.cmpi ne, %1, %c0_i32_0 : i32
    scf.if %2 {
      %c0_10 = arith.constant 0 : index
      %c0_11 = arith.constant 0 : index
      %12 = vector.load %arg5[%c0_10, %c0_11] : memref<1x128xf32, #tpu.memory_space<vmem>>, vector<1x128xf32>
      %13 = vector.shape_cast %12 : vector<1x128xf32> to vector<1x128xf32>
      %14 = vector.broadcast %13 : vector<1x128xf32> to vector<16x128xf32>
      %c0_12 = arith.constant 0 : index
      %c0_13 = arith.constant 0 : index
      %15 = vector.load %arg7[%c0_12, %c0_13] : memref<16x128xf32, #tpu.memory_space<vmem>>, vector<16x128xf32>
      tpu.vector_store %arg7[%c0_12, %c0_13], %14 {strides = array<i32>} : memref<16x128xf32, #tpu.memory_space<vmem>>, vector<16x128xf32>,
    } else {
    }
    %c0 = arith.constant 0 : index
    %c0_1 = arith.constant 0 : index
    %3 = vector.load %arg7[%c0, %c0_1] : memref<16x128xf32, #tpu.memory_space<vmem>>, vector<16x128xf32>
    %c0_2 = arith.constant 0 : index
    %c0_3 = arith.constant 0 : index
    %4 = vector.load %arg3[%c0_2, %c0_3] : memref<16x128xbf16, #tpu.memory_space<vmem>>, vector<16x128xbf16>
    %c0_4 = arith.constant 0 : index
    %c0_5 = arith.constant 0 : index
    %5 = vector.load %arg4[%c0_4, %c0_5] : memref<128x128xbf16, #tpu.memory_space<vmem>>, vector<128x128xbf16>
    %cst = arith.constant dense<0.000000e+00> : vector<16x128xf32>
    %6 = tpu.matmul %4, %5, %cst {dimension_numbers = #tpu.dot_dimension_numbers<[1], [0], [0], [1], [0, 0, 1, 1], [], []>} : vector<16x128xbf16>, vector<128x128xbf16>, vector<16x128xf32> -> vector<16x128xf32>
    %7 = arith.addf %3, %6 : vector<16x128xf32>
    %c0_6 = arith.constant 0 : index
    %c0_7 = arith.constant 0 : index
    %8 = vector.load %arg7[%c0_6, %c0_7] : memref<16x128xf32, #tpu.memory_space<vmem>>, vector<16x128xf32>
    tpu.vector_store %arg7[%c0_6, %c0_7], %7 {strides = array<i32>} : memref<16x128xf32, #tpu.memory_space<vmem>>, vector<16x128xf32>,
    %c0_i32_8 = arith.constant 0 : i32
    %9 = arith.cmpi eq, %arg2, %c0_i32_8 : i32
    %10 = arith.extui %9 : i1 to i32
    %c0_i32_9 = arith.constant 0 : i32
    %11 = arith.cmpi ne, %10, %c0_i32_9 : i32
    scf.if %11 {
      %c0_10 = arith.constant 0 : index
      %c0_11 = arith.constant 0 : index
      %12 = vector.load %arg7[%c0_10, %c0_11] : memref<16x128xf32, #tpu.memory_space<vmem>>, vector<16x128xf32>
      %c0_12 = arith.constant 0 : index
      %c0_13 = arith.constant 0 : index
      %13 = vector.load %arg6[%c0_12, %c0_13] : memref<16x128xf32, #tpu.memory_space<vmem>>, vector<16x128xf32>
      tpu.vector_store %arg6[%c0_12, %c0_13], %12 {strides = array<i32>} : memref<16x128xf32, #tpu.memory_space<vmem>>, vector<16x128xf32>,
    } else {
    }
    return
  }
  func.func @transform_0(%arg0: i32, %arg1: i32, %arg2: i32) -> (i32, i32) {
    %c0_i32 = arith.constant 0 : i32
    return %arg0, %arg2 : i32, i32
  }
  func.func @transform_1(%arg0: i32, %arg1: i32, %arg2: i32) -> (i32, i32) {
    %c0_i32 = arith.constant 0 : i32
    return %arg2, %arg1 : i32, i32
  }
  func.func @transform_2(%arg0: i32, %arg1: i32, %arg2: i32) -> (i32, i32) {
    %c0_i32 = arith.constant 0 : i32
    %c0_i32_0 = arith.constant 0 : i32
    return %c0_i32, %arg1 : i32, i32
  }
  func.func @transform_3(%arg0: i32, %arg1: i32, %arg2: i32) -> (i32, i32) {
    %c0_i32 = arith.constant 0 : i32
    return %arg0, %arg1 : i32, i32
  }
}

module attributes {stable_mosaic.version = 11 : i64} {
  func.func @_rnn_chunk_kernel(%arg0: i32, %arg1: i32, %arg2: memref<8x8x128xf32, #tpu.memory_space<vmem>>, %arg3: memref<8x128xf32, #tpu.memory_space<vmem>>, %arg4: memref<128x128xbf16, #tpu.memory_space<vmem>>, %arg5: memref<8x8x128xbf16, #tpu.memory_space<vmem>>, %arg6: memref<8x128xf32, #tpu.memory_space<vmem>>, %arg7: memref<8x128xf32, #tpu.memory_space<vmem>>) attributes {dimension_semantics = [#tpu.dimension_semantics<parallel>, #tpu.dimension_semantics<arbitrary>], iteration_bounds = array<i64: 1, 1>, scalar_prefetch = 0 : i64, scratch_operands = 1 : i64, tpu.core_type = #tpu.core_type<tc>, window_params = [{transform_indices = @transform_0, window_bounds = array<i64: 8, 8, 128>}, {transform_indices = @transform_1, window_bounds = array<i64: 8, 128>}, {pipeline_mode = #tpu.pipeline_mode<synchronous>, transform_indices = @transform_2, window_bounds = array<i64: 128, 128>}, {transform_indices = @transform_3, window_bounds = array<i64: 8, 8, 128>}, {transform_indices = @transform_4, window_bounds = array<i64: 8, 128>}]} {
    %c0_i32 = arith.constant 0 : i32
    %0 = arith.cmpi eq, %arg1, %c0_i32 : i32
    %1 = arith.extui %0 : i1 to i32
    %c0_i32_0 = arith.constant 0 : i32
    %2 = arith.cmpi ne, %1, %c0_i32_0 : i32
    scf.if %2 {
      %c0_48 = arith.constant 0 : index
      %c0_49 = arith.constant 0 : index
      %105 = vector.load %arg3[%c0_48, %c0_49] : memref<8x128xf32, #tpu.memory_space<vmem>>, vector<8x128xf32>
      %c0_50 = arith.constant 0 : index
      %c0_51 = arith.constant 0 : index
      %106 = vector.load %arg7[%c0_50, %c0_51] : memref<8x128xf32, #tpu.memory_space<vmem>>, vector<8x128xf32>
      tpu.vector_store %arg7[%c0_50, %c0_51], %105 {strides = array<i32>} : memref<8x128xf32, #tpu.memory_space<vmem>>, vector<8x128xf32>,
    } else {
    }
    %c0 = arith.constant 0 : index
    %c0_1 = arith.constant 0 : index
    %3 = vector.load %arg4[%c0, %c0_1] : memref<128x128xbf16, #tpu.memory_space<vmem>>, vector<128x128xbf16>
    %c0_2 = arith.constant 0 : index
    %c0_3 = arith.constant 0 : index
    %4 = vector.load %arg7[%c0_2, %c0_3] : memref<8x128xf32, #tpu.memory_space<vmem>>, vector<8x128xf32>
    %c0_i32_4 = arith.constant 0 : i32
    %5 = arith.index_cast %c0_i32_4 : i32 to index
    %c0_5 = arith.constant 0 : index
    %c0_6 = arith.constant 0 : index
    %6 = vector.load %arg2[%5, %c0_5, %c0_6] : memref<8x8x128xf32, #tpu.memory_space<vmem>>, vector<1x8x128xf32>
    %7 = vector.shape_cast %6 : vector<1x8x128xf32> to vector<8x128xf32>
    %8 = arith.truncf %4 : vector<8x128xf32> to vector<8x128xbf16>
    %cst = arith.constant dense<0.000000e+00> : vector<8x128xf32>
    %9 = tpu.matmul %8, %3, %cst {dimension_numbers = #tpu.dot_dimension_numbers<[1], [0], [0], [1], [0, 0, 1, 1], [], []>} : vector<8x128xbf16>, vector<128x128xbf16>, vector<8x128xf32> -> vector<8x128xf32>
    %10 = arith.addf %7, %9 : vector<8x128xf32>
    %11 = math.tanh %10 : vector<8x128xf32>
    %12 = arith.truncf %11 : vector<8x128xf32> to vector<8x128xbf16>
    %13 = arith.index_cast %c0_i32_4 : i32 to index
    %c0_7 = arith.constant 0 : index
    %c0_8 = arith.constant 0 : index
    %14 = vector.load %arg5[%13, %c0_7, %c0_8] : memref<8x8x128xbf16, #tpu.memory_space<vmem>>, vector<1x8x128xbf16>
    %15 = vector.shape_cast %14 : vector<1x8x128xbf16> to vector<8x128xbf16>
    %16 = vector.shape_cast %12 : vector<8x128xbf16> to vector<1x8x128xbf16>
    tpu.vector_store %arg5[%13, %c0_7, %c0_8], %16 {strides = array<i32>} : memref<8x8x128xbf16, #tpu.memory_space<vmem>>, vector<1x8x128xbf16>,
    %c1_i32 = arith.constant 1 : i32
    %17 = arith.index_cast %c1_i32 : i32 to index
    %c0_9 = arith.constant 0 : index
    %c0_10 = arith.constant 0 : index
    %18 = vector.load %arg2[%17, %c0_9, %c0_10] : memref<8x8x128xf32, #tpu.memory_space<vmem>>, vector<1x8x128xf32>
    %19 = vector.shape_cast %18 : vector<1x8x128xf32> to vector<8x128xf32>
    %20 = arith.truncf %11 : vector<8x128xf32> to vector<8x128xbf16>
    %cst_11 = arith.constant dense<0.000000e+00> : vector<8x128xf32>
    %21 = tpu.matmul %20, %3, %cst_11 {dimension_numbers = #tpu.dot_dimension_numbers<[1], [0], [0], [1], [0, 0, 1, 1], [], []>} : vector<8x128xbf16>, vector<128x128xbf16>, vector<8x128xf32> -> vector<8x128xf32>
    %22 = arith.addf %19, %21 : vector<8x128xf32>
    %23 = math.tanh %22 : vector<8x128xf32>
    %24 = arith.truncf %23 : vector<8x128xf32> to vector<8x128xbf16>
    %25 = arith.index_cast %c1_i32 : i32 to index
    %c0_12 = arith.constant 0 : index
    %c0_13 = arith.constant 0 : index
    %26 = vector.load %arg5[%25, %c0_12, %c0_13] : memref<8x8x128xbf16, #tpu.memory_space<vmem>>, vector<1x8x128xbf16>
    %27 = vector.shape_cast %26 : vector<1x8x128xbf16> to vector<8x128xbf16>
    %28 = vector.shape_cast %24 : vector<8x128xbf16> to vector<1x8x128xbf16>
    tpu.vector_store %arg5[%25, %c0_12, %c0_13], %28 {strides = array<i32>} : memref<8x8x128xbf16, #tpu.memory_space<vmem>>, vector<1x8x128xbf16>,
    %c2_i32 = arith.constant 2 : i32
    %29 = arith.index_cast %c2_i32 : i32 to index
    %c0_14 = arith.constant 0 : index
    %c0_15 = arith.constant 0 : index
    %30 = vector.load %arg2[%29, %c0_14, %c0_15] : memref<8x8x128xf32, #tpu.memory_space<vmem>>, vector<1x8x128xf32>
    %31 = vector.shape_cast %30 : vector<1x8x128xf32> to vector<8x128xf32>
    %32 = arith.truncf %23 : vector<8x128xf32> to vector<8x128xbf16>
    %cst_16 = arith.constant dense<0.000000e+00> : vector<8x128xf32>
    %33 = tpu.matmul %32, %3, %cst_16 {dimension_numbers = #tpu.dot_dimension_numbers<[1], [0], [0], [1], [0, 0, 1, 1], [], []>} : vector<8x128xbf16>, vector<128x128xbf16>, vector<8x128xf32> -> vector<8x128xf32>
    %34 = arith.addf %31, %33 : vector<8x128xf32>
    %35 = math.tanh %34 : vector<8x128xf32>
    %36 = arith.truncf %35 : vector<8x128xf32> to vector<8x128xbf16>
    %37 = arith.index_cast %c2_i32 : i32 to index
    %c0_17 = arith.constant 0 : index
    %c0_18 = arith.constant 0 : index
    %38 = vector.load %arg5[%37, %c0_17, %c0_18] : memref<8x8x128xbf16, #tpu.memory_space<vmem>>, vector<1x8x128xbf16>
    %39 = vector.shape_cast %38 : vector<1x8x128xbf16> to vector<8x128xbf16>
    %40 = vector.shape_cast %36 : vector<8x128xbf16> to vector<1x8x128xbf16>
    tpu.vector_store %arg5[%37, %c0_17, %c0_18], %40 {strides = array<i32>} : memref<8x8x128xbf16, #tpu.memory_space<vmem>>, vector<1x8x128xbf16>,
    %c3_i32 = arith.constant 3 : i32
    %41 = arith.index_cast %c3_i32 : i32 to index
    %c0_19 = arith.constant 0 : index
    %c0_20 = arith.constant 0 : index
    %42 = vector.load %arg2[%41, %c0_19, %c0_20] : memref<8x8x128xf32, #tpu.memory_space<vmem>>, vector<1x8x128xf32>
    %43 = vector.shape_cast %42 : vector<1x8x128xf32> to vector<8x128xf32>
    %44 = arith.truncf %35 : vector<8x128xf32> to vector<8x128xbf16>
    %cst_21 = arith.constant dense<0.000000e+00> : vector<8x128xf32>
    %45 = tpu.matmul %44, %3, %cst_21 {dimension_numbers = #tpu.dot_dimension_numbers<[1], [0], [0], [1], [0, 0, 1, 1], [], []>} : vector<8x128xbf16>, vector<128x128xbf16>, vector<8x128xf32> -> vector<8x128xf32>
    %46 = arith.addf %43, %45 : vector<8x128xf32>
    %47 = math.tanh %46 : vector<8x128xf32>
    %48 = arith.truncf %47 : vector<8x128xf32> to vector<8x128xbf16>
    %49 = arith.index_cast %c3_i32 : i32 to index
    %c0_22 = arith.constant 0 : index
    %c0_23 = arith.constant 0 : index
    %50 = vector.load %arg5[%49, %c0_22, %c0_23] : memref<8x8x128xbf16, #tpu.memory_space<vmem>>, vector<1x8x128xbf16>
    %51 = vector.shape_cast %50 : vector<1x8x128xbf16> to vector<8x128xbf16>
    %52 = vector.shape_cast %48 : vector<8x128xbf16> to vector<1x8x128xbf16>
    tpu.vector_store %arg5[%49, %c0_22, %c0_23], %52 {strides = array<i32>} : memref<8x8x128xbf16, #tpu.memory_space<vmem>>, vector<1x8x128xbf16>,
    %c4_i32 = arith.constant 4 : i32
    %53 = arith.index_cast %c4_i32 : i32 to index
    %c0_24 = arith.constant 0 : index
    %c0_25 = arith.constant 0 : index
    %54 = vector.load %arg2[%53, %c0_24, %c0_25] : memref<8x8x128xf32, #tpu.memory_space<vmem>>, vector<1x8x128xf32>
    %55 = vector.shape_cast %54 : vector<1x8x128xf32> to vector<8x128xf32>
    %56 = arith.truncf %47 : vector<8x128xf32> to vector<8x128xbf16>
    %cst_26 = arith.constant dense<0.000000e+00> : vector<8x128xf32>
    %57 = tpu.matmul %56, %3, %cst_26 {dimension_numbers = #tpu.dot_dimension_numbers<[1], [0], [0], [1], [0, 0, 1, 1], [], []>} : vector<8x128xbf16>, vector<128x128xbf16>, vector<8x128xf32> -> vector<8x128xf32>
    %58 = arith.addf %55, %57 : vector<8x128xf32>
    %59 = math.tanh %58 : vector<8x128xf32>
    %60 = arith.truncf %59 : vector<8x128xf32> to vector<8x128xbf16>
    %61 = arith.index_cast %c4_i32 : i32 to index
    %c0_27 = arith.constant 0 : index
    %c0_28 = arith.constant 0 : index
    %62 = vector.load %arg5[%61, %c0_27, %c0_28] : memref<8x8x128xbf16, #tpu.memory_space<vmem>>, vector<1x8x128xbf16>
    %63 = vector.shape_cast %62 : vector<1x8x128xbf16> to vector<8x128xbf16>
    %64 = vector.shape_cast %60 : vector<8x128xbf16> to vector<1x8x128xbf16>
    tpu.vector_store %arg5[%61, %c0_27, %c0_28], %64 {strides = array<i32>} : memref<8x8x128xbf16, #tpu.memory_space<vmem>>, vector<1x8x128xbf16>,
    %c5_i32 = arith.constant 5 : i32
    %65 = arith.index_cast %c5_i32 : i32 to index
    %c0_29 = arith.constant 0 : index
    %c0_30 = arith.constant 0 : index
    %66 = vector.load %arg2[%65, %c0_29, %c0_30] : memref<8x8x128xf32, #tpu.memory_space<vmem>>, vector<1x8x128xf32>
    %67 = vector.shape_cast %66 : vector<1x8x128xf32> to vector<8x128xf32>
    %68 = arith.truncf %59 : vector<8x128xf32> to vector<8x128xbf16>
    %cst_31 = arith.constant dense<0.000000e+00> : vector<8x128xf32>
    %69 = tpu.matmul %68, %3, %cst_31 {dimension_numbers = #tpu.dot_dimension_numbers<[1], [0], [0], [1], [0, 0, 1, 1], [], []>} : vector<8x128xbf16>, vector<128x128xbf16>, vector<8x128xf32> -> vector<8x128xf32>
    %70 = arith.addf %67, %69 : vector<8x128xf32>
    %71 = math.tanh %70 : vector<8x128xf32>
    %72 = arith.truncf %71 : vector<8x128xf32> to vector<8x128xbf16>
    %73 = arith.index_cast %c5_i32 : i32 to index
    %c0_32 = arith.constant 0 : index
    %c0_33 = arith.constant 0 : index
    %74 = vector.load %arg5[%73, %c0_32, %c0_33] : memref<8x8x128xbf16, #tpu.memory_space<vmem>>, vector<1x8x128xbf16>
    %75 = vector.shape_cast %74 : vector<1x8x128xbf16> to vector<8x128xbf16>
    %76 = vector.shape_cast %72 : vector<8x128xbf16> to vector<1x8x128xbf16>
    tpu.vector_store %arg5[%73, %c0_32, %c0_33], %76 {strides = array<i32>} : memref<8x8x128xbf16, #tpu.memory_space<vmem>>, vector<1x8x128xbf16>,
    %c6_i32 = arith.constant 6 : i32
    %77 = arith.index_cast %c6_i32 : i32 to index
    %c0_34 = arith.constant 0 : index
    %c0_35 = arith.constant 0 : index
    %78 = vector.load %arg2[%77, %c0_34, %c0_35] : memref<8x8x128xf32, #tpu.memory_space<vmem>>, vector<1x8x128xf32>
    %79 = vector.shape_cast %78 : vector<1x8x128xf32> to vector<8x128xf32>
    %80 = arith.truncf %71 : vector<8x128xf32> to vector<8x128xbf16>
    %cst_36 = arith.constant dense<0.000000e+00> : vector<8x128xf32>
    %81 = tpu.matmul %80, %3, %cst_36 {dimension_numbers = #tpu.dot_dimension_numbers<[1], [0], [0], [1], [0, 0, 1, 1], [], []>} : vector<8x128xbf16>, vector<128x128xbf16>, vector<8x128xf32> -> vector<8x128xf32>
    %82 = arith.addf %79, %81 : vector<8x128xf32>
    %83 = math.tanh %82 : vector<8x128xf32>
    %84 = arith.truncf %83 : vector<8x128xf32> to vector<8x128xbf16>
    %85 = arith.index_cast %c6_i32 : i32 to index
    %c0_37 = arith.constant 0 : index
    %c0_38 = arith.constant 0 : index
    %86 = vector.load %arg5[%85, %c0_37, %c0_38] : memref<8x8x128xbf16, #tpu.memory_space<vmem>>, vector<1x8x128xbf16>
    %87 = vector.shape_cast %86 : vector<1x8x128xbf16> to vector<8x128xbf16>
    %88 = vector.shape_cast %84 : vector<8x128xbf16> to vector<1x8x128xbf16>
    tpu.vector_store %arg5[%85, %c0_37, %c0_38], %88 {strides = array<i32>} : memref<8x8x128xbf16, #tpu.memory_space<vmem>>, vector<1x8x128xbf16>,
    %c7_i32 = arith.constant 7 : i32
    %89 = arith.index_cast %c7_i32 : i32 to index
    %c0_39 = arith.constant 0 : index
    %c0_40 = arith.constant 0 : index
    %90 = vector.load %arg2[%89, %c0_39, %c0_40] : memref<8x8x128xf32, #tpu.memory_space<vmem>>, vector<1x8x128xf32>
    %91 = vector.shape_cast %90 : vector<1x8x128xf32> to vector<8x128xf32>
    %92 = arith.truncf %83 : vector<8x128xf32> to vector<8x128xbf16>
    %cst_41 = arith.constant dense<0.000000e+00> : vector<8x128xf32>
    %93 = tpu.matmul %92, %3, %cst_41 {dimension_numbers = #tpu.dot_dimension_numbers<[1], [0], [0], [1], [0, 0, 1, 1], [], []>} : vector<8x128xbf16>, vector<128x128xbf16>, vector<8x128xf32> -> vector<8x128xf32>
    %94 = arith.addf %91, %93 : vector<8x128xf32>
    %95 = math.tanh %94 : vector<8x128xf32>
    %96 = arith.truncf %95 : vector<8x128xf32> to vector<8x128xbf16>
    %97 = arith.index_cast %c7_i32 : i32 to index
    %c0_42 = arith.constant 0 : index
    %c0_43 = arith.constant 0 : index
    %98 = vector.load %arg5[%97, %c0_42, %c0_43] : memref<8x8x128xbf16, #tpu.memory_space<vmem>>, vector<1x8x128xbf16>
    %99 = vector.shape_cast %98 : vector<1x8x128xbf16> to vector<8x128xbf16>
    %100 = vector.shape_cast %96 : vector<8x128xbf16> to vector<1x8x128xbf16>
    tpu.vector_store %arg5[%97, %c0_42, %c0_43], %100 {strides = array<i32>} : memref<8x8x128xbf16, #tpu.memory_space<vmem>>, vector<1x8x128xbf16>,
    %c8_i32 = arith.constant 8 : i32
    %c0_44 = arith.constant 0 : index
    %c0_45 = arith.constant 0 : index
    %101 = vector.load %arg7[%c0_44, %c0_45] : memref<8x128xf32, #tpu.memory_space<vmem>>, vector<8x128xf32>
    tpu.vector_store %arg7[%c0_44, %c0_45], %95 {strides = array<i32>} : memref<8x128xf32, #tpu.memory_space<vmem>>, vector<8x128xf32>,
    %c0_i32_46 = arith.constant 0 : i32
    %102 = arith.cmpi eq, %arg1, %c0_i32_46 : i32
    %103 = arith.extui %102 : i1 to i32
    %c0_i32_47 = arith.constant 0 : i32
    %104 = arith.cmpi ne, %103, %c0_i32_47 : i32
    scf.if %104 {
      %c0_48 = arith.constant 0 : index
      %c0_49 = arith.constant 0 : index
      %105 = vector.load %arg6[%c0_48, %c0_49] : memref<8x128xf32, #tpu.memory_space<vmem>>, vector<8x128xf32>
      tpu.vector_store %arg6[%c0_48, %c0_49], %95 {strides = array<i32>} : memref<8x128xf32, #tpu.memory_space<vmem>>, vector<8x128xf32>,
    } else {
    }
    return
  }
  func.func @transform_0(%arg0: i32, %arg1: i32) -> (i32, i32, i32) {
    %c0_i32 = arith.constant 0 : i32
    %c0_i32_0 = arith.constant 0 : i32
    return %arg1, %arg0, %c0_i32 : i32, i32, i32
  }
  func.func @transform_1(%arg0: i32, %arg1: i32) -> (i32, i32) {
    %c0_i32 = arith.constant 0 : i32
    %c0_i32_0 = arith.constant 0 : i32
    return %arg0, %c0_i32 : i32, i32
  }
  func.func @transform_2(%arg0: i32, %arg1: i32) -> (i32, i32) {
    %c0_i32 = arith.constant 0 : i32
    %c0_i32_0 = arith.constant 0 : i32
    %c0_i32_1 = arith.constant 0 : i32
    return %c0_i32, %c0_i32_0 : i32, i32
  }
  func.func @transform_3(%arg0: i32, %arg1: i32) -> (i32, i32, i32) {
    %c0_i32 = arith.constant 0 : i32
    %c0_i32_0 = arith.constant 0 : i32
    return %arg1, %arg0, %c0_i32 : i32, i32, i32
  }
  func.func @transform_4(%arg0: i32, %arg1: i32) -> (i32, i32) {
    %c0_i32 = arith.constant 0 : i32
    %c0_i32_0 = arith.constant 0 : i32
    return %arg0, %c0_i32 : i32, i32
  }
}

</mosaic_0001>

<llo_original>
// kernel: rnn_language_model_forward.9
$region0: #{rnn_language_model_forward.9}
  #allocation0 [shape = 'u32[]', space=smem, size = 0x4, offset = 0x4, fixed_abs, tag = 'smem constant byte address 0x4 - core index']
  #allocation1 [shape = 'u32[144,128]{1,0:T(1,128)}', space=vmem, size = 0x12000, scoped, tag = 'internal scratch']
  #allocation2 [shape = 'f32[16,128]{1,0:T(8,128)}', space=vmem, size = 0x2000, scoped, tag = 'scratch operand']
  %s0 = inlined_call_operand.vmem [shape: bf16[16,128], index: 0, kind: input, shape index: {}]
  %s1 = inlined_call_operand.vmem [shape: bf16[128,128], index: 1, kind: input, shape index: {}]
  %s2 = inlined_call_operand.vmem [shape: f32[1,128], index: 2, kind: input, shape index: {}]
  %s3 = inlined_call_operand.hbm [shape: f32[16,128], index: 3, kind: output, shape index: {}]
  %s4 = sld [smem:[#allocation0]]
  $region30: #{rnn_language_model_forward.9} parent=0
    _
  %s6 = ssub.s32 1, %s4
  %s7 = scalar_select 0, %s6, %s4
  $region1: #{rnn_language_model_forward.9} parent=0
    #allocation3 [shape = 'u8[8192]{0}', space=vmem, size = 0x2000, scoped, tag = 'output window, operand 0, single buffered']
    #allocation4 [shape = 's32[1]{0}', space=sflag, size = 0x4, scoped, tag = 'scoped memory for rnn_language_model_forward.9']
    %8 = vsyncpa [#allocation4], 0
    // Predicated region
    $region2: #{rnn_language_model_forward.9} parent=1 // pred_check
      _
    $region3: #{rnn_language_model_forward.9} parent=1 // pred_check_branch
      %10 = sbr.rel (0) target = $region5
    $region4: #{rnn_language_model_forward.9} parent=1 // pred_region
      _
    $region5: #{rnn_language_model_forward.9} parent=1 // pred_fallthru
      _
    // Predicated region
    $region6: #{rnn_language_model_forward.9} parent=1 // pred_check
      _
    $region7: #{rnn_language_model_forward.9} parent=1 // pred_check_branch
      %12 = sbr.rel (0) target = $region9
    $region8: #{rnn_language_model_forward.9} parent=1 // pred_region
      _
    $region9: #{rnn_language_model_forward.9} parent=1 // pred_fallthru
      _
    // Predicated region
    $region10: #{rnn_language_model_forward.9} parent=1 // pred_check
      _
    $region11: #{rnn_language_model_forward.9} parent=1 // pred_check_branch
      %14 = sbr.rel (0) target = $region13
    $region12: #{rnn_language_model_forward.9} parent=1 // pred_region
      _
    $region13: #{rnn_language_model_forward.9} parent=1 // pred_fallthru
      _
    %p16 = scmp.eq.s32.totalorder 0, 0
    // Predicated region
    $region14: #{rnn_language_model_forward.9} parent=1 // pred_check
      %p17 = pneg %p16
    $region15: #{rnn_language_model_forward.9} parent=1 // pred_check_branch
      %19 = sbr.rel (%p17) target = $region17
    $region16: #{rnn_language_model_forward.9} parent=1 // pred_region
      %v20 = vld [vmem:[%s2] sm:$0x1]
      %v22 = vlaneseq
      %v23 = vshrl.u32 %v22, 7
      %v24 = vsub.s32 0, %v23
      %v25 = vrot.slane %v20, %v24
      %27 = vst [vmem:[#allocation2] sm:$0xff] %v25
      %28 = vst [vmem:[#allocation2 + $0x8] sm:$0xff] %v25
    $region17: #{rnn_language_model_forward.9} parent=1 // pred_fallthru
      _
    %v29 = vld [vmem:[#allocation2] sm:$0xff]
    %v30 = vld [vmem:[#allocation2 + $0x8] sm:$0xff]
    %v31 = vld [vmem:[%s0] sm:$0xf]
    %v32 = vld [vmem:[%s0 + $0x4] sm:$0xf]
    %v33 = vld [vmem:[%s1] sm:$0xf]
    %v34 = vld [vmem:[%s1 + $0x4] sm:$0xf]
    %v35 = vld [vmem:[%s1 + $0x8] sm:$0xf]
    %v36 = vld [vmem:[%s1 + $0xc] sm:$0xf]
    %v37 = vld [vmem:[%s1 + $0x10] sm:$0xf]
    %v38 = vld [vmem:[%s1 + $0x14] sm:$0xf]
    %v39 = vld [vmem:[%s1 + $0x18] sm:$0xf]
    %v40 = vld [vmem:[%s1 + $0x1c] sm:$0xf]
    %v41 = vld [vmem:[%s1 + $0x20] sm:$0xf]
    %v42 = vld [vmem:[%s1 + $0x24] sm:$0xf]
    %v43 = vld [vmem:[%s1 + $0x28] sm:$0xf]
    %v44 = vld [vmem:[%s1 + $0x2c] sm:$0xf]
    %v45 = vld [vmem:[%s1 + $0x30] sm:$0xf]
    %v46 = vld [vmem:[%s1 + $0x34] sm:$0xf]
    %v47 = vld [vmem:[%s1 + $0x38] sm:$0xf]
    %v48 = vld [vmem:[%s1 + $0x3c] sm:$0xf]
    %v51 = vunpack.c.l.b16 %v31
    %v52 = vunpack.c.l.b16 %v32
    %v53 = vpack.c.b16 %v52, %v51
    %v71 = vunpack.c.l.b16 %v33
    %v72 = vunpack.c.l.b16 %v34
    %v73 = vunpack.c.l.b16 %v35
    %v74 = vunpack.c.l.b16 %v36
    %v75 = vunpack.c.l.b16 %v37
    %v76 = vunpack.c.l.b16 %v38
    %v77 = vunpack.c.l.b16 %v39
    %v78 = vunpack.c.l.b16 %v40
    %v79 = vunpack.c.l.b16 %v41
    %v80 = vunpack.c.l.b16 %v42
    %v81 = vunpack.c.l.b16 %v43
    %v82 = vunpack.c.l.b16 %v44
    %v83 = vunpack.c.l.b16 %v45
    %v84 = vunpack.c.l.b16 %v46
    %v85 = vunpack.c.l.b16 %v47
    %v86 = vunpack.c.l.b16 %v48
    %v87 = vpack.c.b16 %v72, %v71
    %v88 = vpack.c.b16 %v74, %v73
    %v89 = vpack.c.b16 %v76, %v75
    %v90 = vpack.c.b16 %v78, %v77
    %v91 = vpack.c.b16 %v80, %v79
    %v92 = vpack.c.b16 %v82, %v81
    %v93 = vpack.c.b16 %v84, %v83
    %v94 = vpack.c.b16 %v86, %v85
    %103 = vmatprep.subr.bf16.mxu0 0
    %104 = vmatpush1.bf16.msra.mxu0 %v94
    %105 = vmatprep.subr.bf16.mxu0 0
    %106 = vmatpush1.bf16.msra.mxu0 %v93
    %107 = vmatprep.subr.bf16.mxu0 0
    %108 = vmatpush1.bf16.msra.mxu0 %v92
    %109 = vmatprep.subr.bf16.mxu0 0
    %110 = vmatpush1.bf16.msra.mxu0 %v91
    %111 = vmatprep.subr.bf16.mxu0 0
    %112 = vmatpush1.bf16.msra.mxu0 %v90
    %113 = vmatprep.subr.bf16.mxu0 0
    %114 = vmatpush1.bf16.msra.mxu0 %v89
    %115 = vmatprep.subr.bf16.mxu0 0
    %116 = vmatpush1.bf16.msra.mxu0 %v88
    %117 = vmatprep.subr.bf16.mxu0 0
    %118 = vmatpush1.bf16.msra.mxu0 %v87
    %119 = vmatprep.subr.bf16.mxu0 0
    %120 = vmatpush2.bf16.msra.mxu0 0
    %121 = vmatprep.subr.bf16.mxu0 0
    %122 = vmatpush2.bf16.msra.mxu0 0
    %123 = vmatprep.subr.bf16.mxu0 0
    %124 = vmatpush2.bf16.msra.mxu0 0
    %125 = vmatprep.subr.bf16.mxu0 0
    %126 = vmatpush2.bf16.msra.mxu0 0
    %127 = vmatprep.subr.bf16.mxu0 0
    %128 = vmatpush2.bf16.msra.mxu0 0
    %129 = vmatprep.subr.bf16.mxu0 0
    %130 = vmatpush2.bf16.msra.mxu0 0
    %131 = vmatprep.subr.bf16.mxu0 0
    %132 = vmatpush2.bf16.msra.mxu0 0
    %133 = vmatprep.subr.bf16.mxu0 0
    %134 = vmatpush2.bf16.msra.mxu0 0
    %135 = vmatprep.mubr.bf16.mxu0 0
    %136 = vmatmul.mubr.bf16.gmra.mxu0 %v53
    %v137 = vpop.f32.mrf.mxu0
    %v138 = vadd.f32 0.0, %v137
    %v139 = vpop.f32.mrf.mxu0
    %v140 = vpop.f32.mrf.mxu0
    %v141 = vadd.f32 0.0, %v140
    %v142 = vpop.f32.mrf.mxu0
    %143 = vdwg.mxu0
    %v144 = vadd.f32 %v29, %v138
    %v145 = vadd.f32 %v30, %v141
    %146 = vst [vmem:[#allocation2] sm:$0xff] %v144
    %147 = vst [vmem:[#allocation2 + $0x8] sm:$0xff] %v145
    // Predicated region
    $region18: #{rnn_language_model_forward.9} parent=1 // pred_check
      %p148 = pneg %p16
    $region19: #{rnn_language_model_forward.9} parent=1 // pred_check_branch
      %150 = sbr.rel (%p148) target = $region21
    $region20: #{rnn_language_model_forward.9} parent=1 // pred_region
      %v151 = vld [vmem:[#allocation2] sm:$0xff]
      %v152 = vld [vmem:[#allocation2 + $0x8] sm:$0xff]
      %153 = vst [vmem:[#allocation3] sm:$0xff] %v151
      %154 = vst [vmem:[#allocation3 + $0x8] sm:$0xff] %v152
    $region21: #{rnn_language_model_forward.9} parent=1 // pred_fallthru
      _
    // Predicated region
    $region22: #{rnn_language_model_forward.9} parent=1 // pred_check
      _
    $region23: #{rnn_language_model_forward.9} parent=1 // pred_check_branch
      %156 = sbr.rel (0) target = $region25
    $region24: #{rnn_language_model_forward.9} parent=1 // pred_region
      %s158 = ssub.s32 256, 256
      %159 = vsyncadd [#allocation4], %s158
      %s160 = sshll.u32 [#allocation3], 4
      %s161 = int_to_ptr.vmem [resolvable:$true] %s160
      %166 = dma.vmem_to_hbm [thread:$0]  %s161, 256, %s3, [#allocation4], 128, 128, 8
    $region25: #{rnn_language_model_forward.9} parent=1 // pred_fallthru
      _
    // Predicated region
    $region26: #{rnn_language_model_forward.9} parent=1 // pred_check
      _
    $region27: #{rnn_language_model_forward.9} parent=1 // pred_check_branch
      %168 = sbr.rel (0) target = $region29
    $region28: #{rnn_language_model_forward.9} parent=1 // pred_region
      %169 = dma.done [#allocation4], 256
    $region29: #{rnn_language_model_forward.9} parent=1 // pred_fallthru
      _
    %170 = vsyncpa [#allocation4], 1

// kernel: rnn_language_model_forward.5
$region0: #{rnn_language_model_forward.5}
  #allocation0 [shape = 'u32[]', space=smem, size = 0x4, offset = 0x4, fixed_abs, tag = 'smem constant byte address 0x4 - core index']
  #allocation1 [shape = 'u32[144,128]{1,0:T(1,128)}', space=vmem, size = 0x12000, scoped, tag = 'internal scratch']
  #allocation2 [shape = 'f32[64,128]{1,0:T(8,128)}', space=vmem, size = 0x8000, scoped, tag = 'scratch operand']
  %s0 = inlined_call_operand.vmem [shape: bf16[64,128], index: 0, kind: input, shape index: {}]
  %s1 = inlined_call_operand.vmem [shape: bf16[128,128], index: 1, kind: input, shape index: {}]
  %s2 = inlined_call_operand.vmem [shape: f32[1,128], index: 2, kind: input, shape index: {}]
  %s3 = inlined_call_operand.vmem [shape: f32[64,128], index: 3, kind: output, shape index: {}]
  %s4 = sld [smem:[#allocation0]]
  $region30: #{rnn_language_model_forward.5} parent=0
    _
  %s6 = ssub.s32 1, %s4
  %s7 = scalar_select 0, %s6, %s4
  // Predicated region
  $region2: #{rnn_language_model_forward.5} parent=0 // pred_check
    _
  $region3: #{rnn_language_model_forward.5} parent=0 // pred_check_branch
    %9 = sbr.rel (0) target = $region5
  $region4: #{rnn_language_model_forward.5} parent=0 // pred_region
    _
  $region5: #{rnn_language_model_forward.5} parent=0 // pred_fallthru
    _
  // Predicated region
  $region6: #{rnn_language_model_forward.5} parent=0 // pred_check
    _
  $region7: #{rnn_language_model_forward.5} parent=0 // pred_check_branch
    %11 = sbr.rel (0) target = $region9
  $region8: #{rnn_language_model_forward.5} parent=0 // pred_region
    _
  $region9: #{rnn_language_model_forward.5} parent=0 // pred_fallthru
    _
  // Predicated region
  $region10: #{rnn_language_model_forward.5} parent=0 // pred_check
    _
  $region11: #{rnn_language_model_forward.5} parent=0 // pred_check_branch
    %13 = sbr.rel (0) target = $region13
  $region12: #{rnn_language_model_forward.5} parent=0 // pred_region
    _
  $region13: #{rnn_language_model_forward.5} parent=0 // pred_fallthru
    _
  %p15 = scmp.eq.s32.totalorder 0, 0
  // Predicated region
  $region14: #{rnn_language_model_forward.5} parent=0 // pred_check
    %p16 = pneg %p15
  $region15: #{rnn_language_model_forward.5} parent=0 // pred_check_branch
    %18 = sbr.rel (%p16) target = $region17
  $region16: #{rnn_language_model_forward.5} parent=0 // pred_region
    %v19 = vld [vmem:[%s2] sm:$0x1]
    %v21 = vlaneseq
    %v22 = vshrl.u32 %v21, 7
    %v23 = vsub.s32 0, %v22
    %v24 = vrot.slane %v19, %v23
    %26 = vst [vmem:[#allocation2] sm:$0xff] %v24
    %27 = vst [vmem:[#allocation2 + $0x8] sm:$0xff] %v24
    %28 = vst [vmem:[#allocation2 + $0x10] sm:$0xff] %v24
    %29 = vst [vmem:[#allocation2 + $0x18] sm:$0xff] %v24
    %30 = vst [vmem:[#allocation2 + $0x20] sm:$0xff] %v24
    %31 = vst [vmem:[#allocation2 + $0x28] sm:$0xff] %v24
    %32 = vst [vmem:[#allocation2 + $0x30] sm:$0xff] %v24
    %33 = vst [vmem:[#allocation2 + $0x38] sm:$0xff] %v24
  $region17: #{rnn_language_model_forward.5} parent=0 // pred_fallthru
    _
  %v34 = vld [vmem:[#allocation2] sm:$0xff]
  %v35 = vld [vmem:[#allocation2 + $0x8] sm:$0xff]
  %v36 = vld [vmem:[#allocation2 + $0x10] sm:$0xff]
  %v37 = vld [vmem:[#allocation2 + $0x18] sm:$0xff]
  %v38 = vld [vmem:[#allocation2 + $0x20] sm:$0xff]
  %v39 = vld [vmem:[#allocation2 + $0x28] sm:$0xff]
  %v40 = vld [vmem:[#allocation2 + $0x30] sm:$0xff]
  %v41 = vld [vmem:[#allocation2 + $0x38] sm:$0xff]
  %v42 = vld [vmem:[%s0] sm:$0xf]
  %v43 = vld [vmem:[%s0 + $0x4] sm:$0xf]
  %v44 = vld [vmem:[%s0 + $0x8] sm:$0xf]
  %v45 = vld [vmem:[%s0 + $0xc] sm:$0xf]
  %v46 = vld [vmem:[%s0 + $0x10] sm:$0xf]
  %v47 = vld [vmem:[%s0 + $0x14] sm:$0xf]
  %v48 = vld [vmem:[%s0 + $0x18] sm:$0xf]
  %v49 = vld [vmem:[%s0 + $0x1c] sm:$0xf]
  %v50 = vld [vmem:[%s1] sm:$0xf]
  %v51 = vld [vmem:[%s1 + $0x4] sm:$0xf]
  %v52 = vld [vmem:[%s1 + $0x8] sm:$0xf]
  %v53 = vld [vmem:[%s1 + $0xc] sm:$0xf]
  %v54 = vld [vmem:[%s1 + $0x10] sm:$0xf]
  %v55 = vld [vmem:[%s1 + $0x14] sm:$0xf]
  %v56 = vld [vmem:[%s1 + $0x18] sm:$0xf]
  %v57 = vld [vmem:[%s1 + $0x1c] sm:$0xf]
  %v58 = vld [vmem:[%s1 + $0x20] sm:$0xf]
  %v59 = vld [vmem:[%s1 + $0x24] sm:$0xf]
  %v60 = vld [vmem:[%s1 + $0x28] sm:$0xf]
  %v61 = vld [vmem:[%s1 + $0x2c] sm:$0xf]
  %v62 = vld [vmem:[%s1 + $0x30] sm:$0xf]
  %v63 = vld [vmem:[%s1 + $0x34] sm:$0xf]
  %v64 = vld [vmem:[%s1 + $0x38] sm:$0xf]
  %v65 = vld [vmem:[%s1 + $0x3c] sm:$0xf]
  %v74 = vunpack.c.l.b16 %v42
  %v75 = vunpack.c.l.b16 %v43
  %v76 = vunpack.c.l.b16 %v44
  %v77 = vunpack.c.l.b16 %v45
  %v78 = vunpack.c.l.b16 %v46
  %v79 = vunpack.c.l.b16 %v47
  %v80 = vunpack.c.l.b16 %v48
  %v81 = vunpack.c.l.b16 %v49
  %v82 = vpack.c.b16 %v75, %v74
  %v83 = vpack.c.b16 %v77, %v76
  %v84 = vpack.c.b16 %v79, %v78
  %v85 = vpack.c.b16 %v81, %v80
  %v106 = vunpack.c.l.b16 %v50
  %v107 = vunpack.c.l.b16 %v51
  %v108 = vunpack.c.l.b16 %v52
  %v109 = vunpack.c.l.b16 %v53
  %v110 = vunpack.c.l.b16 %v54
  %v111 = vunpack.c.l.b16 %v55
  %v112 = vunpack.c.l.b16 %v56
  %v113 = vunpack.c.l.b16 %v57
  %v114 = vunpack.c.l.b16 %v58
  %v115 = vunpack.c.l.b16 %v59
  %v116 = vunpack.c.l.b16 %v60
  %v117 = vunpack.c.l.b16 %v61
  %v118 = vunpack.c.l.b16 %v62
  %v119 = vunpack.c.l.b16 %v63
  %v120 = vunpack.c.l.b16 %v64
  %v121 = vunpack.c.l.b16 %v65
  %v122 = vpack.c.b16 %v107, %v106
  %v123 = vpack.c.b16 %v109, %v108
  %v124 = vpack.c.b16 %v111, %v110
  %v125 = vpack.c.b16 %v113, %v112
  %v126 = vpack.c.b16 %v115, %v114
  %v127 = vpack.c.b16 %v117, %v116
  %v128 = vpack.c.b16 %v119, %v118
  %v129 = vpack.c.b16 %v121, %v120
  %138 = vmatprep.subr.bf16.mxu0 0
  %139 = vmatpush1.bf16.msra.mxu0 %v129
  %140 = vmatprep.subr.bf16.mxu0 0
  %141 = vmatpush1.bf16.msra.mxu0 %v128
  %142 = vmatprep.subr.bf16.mxu0 0
  %143 = vmatpush1.bf16.msra.mxu0 %v127
  %144 = vmatprep.subr.bf16.mxu0 0
  %145 = vmatpush1.bf16.msra.mxu0 %v126
  %146 = vmatprep.subr.bf16.mxu0 0
  %147 = vmatpush1.bf16.msra.mxu0 %v125
  %148 = vmatprep.subr.bf16.mxu0 0
  %149 = vmatpush1.bf16.msra.mxu0 %v124
  %150 = vmatprep.subr.bf16.mxu0 0
  %151 = vmatpush1.bf16.msra.mxu0 %v123
  %152 = vmatprep.subr.bf16.mxu0 0
  %153 = vmatpush1.bf16.msra.mxu0 %v122
  %154 = vmatprep.subr.bf16.mxu0 0
  %155 = vmatpush2.bf16.msra.mxu0 0
  %156 = vmatprep.subr.bf16.mxu0 0
  %157 = vmatpush2.bf16.msra.mxu0 0
  %158 = vmatprep.subr.bf16.mxu0 0
  %159 = vmatpush2.bf16.msra.mxu0 0
  %160 = vmatprep.subr.bf16.mxu0 0
  %161 = vmatpush2.bf16.msra.mxu0 0
  %162 = vmatprep.subr.bf16.mxu0 0
  %163 = vmatpush2.bf16.msra.mxu0 0
  %164 = vmatprep.subr.bf16.mxu0 0
  %165 = vmatpush2.bf16.msra.mxu0 0
  %166 = vmatprep.subr.bf16.mxu0 0
  %167 = vmatpush2.bf16.msra.mxu0 0
  %168 = vmatprep.subr.bf16.mxu0 0
  %169 = vmatpush2.bf16.msra.mxu0 0
  %170 = vmatprep.mubr.bf16.mxu0 0
  %171 = vmatmul.mubr.bf16.gmra.mxu0 %v82
  %v172 = vpop.f32.mrf.mxu0
  %v173 = vadd.f32 0.0, %v172
  %v174 = vpop.f32.mrf.mxu0
  %v175 = vpop.f32.mrf.mxu0
  %v176 = vadd.f32 0.0, %v175
  %v177 = vpop.f32.mrf.mxu0
  %178 = vmatprep.mubr.bf16.mxu0 0
  %179 = vmatmul.mubr.bf16.gmra.mxu0 %v83
  %v180 = vpop.f32.mrf.mxu0
  %v181 = vadd.f32 0.0, %v180
  %v182 = vpop.f32.mrf.mxu0
  %v183 = vpop.f32.mrf.mxu0
  %v184 = vadd.f32 0.0, %v183
  %v185 = vpop.f32.mrf.mxu0
  %186 = vmatprep.mubr.bf16.mxu0 0
  %187 = vmatmul.mubr.bf16.gmra.mxu0 %v84
  %v188 = vpop.f32.mrf.mxu0
  %v189 = vadd.f32 0.0, %v188
  %v190 = vpop.f32.mrf.mxu0
  %v191 = vpop.f32.mrf.mxu0
  %v192 = vadd.f32 0.0, %v191
  %v193 = vpop.f32.mrf.mxu0
  %194 = vmatprep.mubr.bf16.mxu0 0
  %195 = vmatmul.mubr.bf16.gmra.mxu0 %v85
  %v196 = vpop.f32.mrf.mxu0
  %v197 = vadd.f32 0.0, %v196
  %v198 = vpop.f32.mrf.mxu0
  %v199 = vpop.f32.mrf.mxu0
  %v200 = vadd.f32 0.0, %v199
  %v201 = vpop.f32.mrf.mxu0
  %202 = vdwg.mxu0
  %v203 = vadd.f32 %v34, %v173
  %v204 = vadd.f32 %v35, %v176
  %v205 = vadd.f32 %v36, %v181
  %v206 = vadd.f32 %v37, %v184
  %v207 = vadd.f32 %v38, %v189
  %v208 = vadd.f32 %v39, %v192
  %v209 = vadd.f32 %v40, %v197
  %v210 = vadd.f32 %v41, %v200
  %211 = vst [vmem:[#allocation2] sm:$0xff] %v203
  %212 = vst [vmem:[#allocation2 + $0x8] sm:$0xff] %v204
  %213 = vst [vmem:[#allocation2 + $0x10] sm:$0xff] %v205
  %214 = vst [vmem:[#allocation2 + $0x18] sm:$0xff] %v206
  %215 = vst [vmem:[#allocation2 + $0x20] sm:$0xff] %v207
  %216 = vst [vmem:[#allocation2 + $0x28] sm:$0xff] %v208
  %217 = vst [vmem:[#allocation2 + $0x30] sm:$0xff] %v209
  %218 = vst [vmem:[#allocation2 + $0x38] sm:$0xff] %v210
  // Predicated region
  $region18: #{rnn_language_model_forward.5} parent=0 // pred_check
    %p219 = pneg %p15
  $region19: #{rnn_language_model_forward.5} parent=0 // pred_check_branch
    %221 = sbr.rel (%p219) target = $region21
  $region20: #{rnn_language_model_forward.5} parent=0 // pred_region
    %v222 = vld [vmem:[#allocation2] sm:$0xff]
    %v223 = vld [vmem:[#allocation2 + $0x8] sm:$0xff]
    %v224 = vld [vmem:[#allocation2 + $0x10] sm:$0xff]
    %v225 = vld [vmem:[#allocation2 + $0x18] sm:$0xff]
    %v226 = vld [vmem:[#allocation2 + $0x20] sm:$0xff]
    %v227 = vld [vmem:[#allocation2 + $0x28] sm:$0xff]
    %v228 = vld [vmem:[#allocation2 + $0x30] sm:$0xff]
    %v229 = vld [vmem:[#allocation2 + $0x38] sm:$0xff]
    %230 = vst [vmem:[%s3] sm:$0xff] %v222
    %231 = vst [vmem:[%s3 + $0x8] sm:$0xff] %v223
    %232 = vst [vmem:[%s3 + $0x10] sm:$0xff] %v224
    %233 = vst [vmem:[%s3 + $0x18] sm:$0xff] %v225
    %234 = vst [vmem:[%s3 + $0x20] sm:$0xff] %v226
    %235 = vst [vmem:[%s3 + $0x28] sm:$0xff] %v227
    %236 = vst [vmem:[%s3 + $0x30] sm:$0xff] %v228
    %237 = vst [vmem:[%s3 + $0x38] sm:$0xff] %v229
  $region21: #{rnn_language_model_forward.5} parent=0 // pred_fallthru
    _
  // Predicated region
  $region22: #{rnn_language_model_forward.5} parent=0 // pred_check
    _
  $region23: #{rnn_language_model_forward.5} parent=0 // pred_check_branch
    %239 = sbr.rel (0) target = $region25
  $region24: #{rnn_language_model_forward.5} parent=0 // pred_region
    _
  $region25: #{rnn_language_model_forward.5} parent=0 // pred_fallthru
    _
  // Predicated region
  $region26: #{rnn_language_model_forward.5} parent=0 // pred_check
    _
  $region27: #{rnn_language_model_forward.5} parent=0 // pred_check_branch
    %241 = sbr.rel (0) target = $region29
  $region28: #{rnn_language_model_forward.5} parent=0 // pred_region
    _
  $region29: #{rnn_language_model_forward.5} parent=0 // pred_fallthru
    _

// kernel: rnn_language_model_forward.6
$region0: #{rnn_language_model_forward.6}
  #allocation0 [shape = 'u32[]', space=smem, size = 0x4, offset = 0x4, fixed_abs, tag = 'smem constant byte address 0x4 - core index']
  #allocation1 [shape = 'u32[144,128]{1,0:T(1,128)}', space=vmem, size = 0x12000, scoped, tag = 'internal scratch']
  #allocation2 [shape = 'f32[8,128]{1,0:T(8,128)}', space=vmem, size = 0x1000, scoped, tag = 'scratch operand']
  %s0 = inlined_call_operand.vmem [shape: f32[8,8,128], index: 0, kind: input, shape index: {}]
  %s1 = inlined_call_operand.vmem [shape: f32[8,128], index: 1, kind: input, shape index: {}]
  %s2 = inlined_call_operand.vmem [shape: bf16[128,128], index: 2, kind: input, shape index: {}]
  %s3 = inlined_call_operand.vmem [shape: bf16[8,8,128], index: 3, kind: output, shape index: {0}]
  %s4 = inlined_call_operand.vmem [shape: f32[8,128], index: 4, kind: output, shape index: {1}]
  %5 = xla_tuple %s3, %s4
  %s6 = sld [smem:[#allocation0]]
  $region38: #{rnn_language_model_forward.6} parent=0
    _
  %s8 = ssub.s32 1, %s6
  %s9 = scalar_select 0, %s8, %s6
  // Predicated region
  $region2: #{rnn_language_model_forward.6} parent=0 // pred_check
    _
  $region3: #{rnn_language_model_forward.6} parent=0 // pred_check_branch
    %11 = sbr.rel (0) target = $region5
  $region4: #{rnn_language_model_forward.6} parent=0 // pred_region
    _
  $region5: #{rnn_language_model_forward.6} parent=0 // pred_fallthru
    _
  // Predicated region
  $region6: #{rnn_language_model_forward.6} parent=0 // pred_check
    _
  $region7: #{rnn_language_model_forward.6} parent=0 // pred_check_branch
    %13 = sbr.rel (0) target = $region9
  $region8: #{rnn_language_model_forward.6} parent=0 // pred_region
    _
  $region9: #{rnn_language_model_forward.6} parent=0 // pred_fallthru
    _
  // Predicated region
  $region10: #{rnn_language_model_forward.6} parent=0 // pred_check
    _
  $region11: #{rnn_language_model_forward.6} parent=0 // pred_check_branch
    %15 = sbr.rel (0) target = $region13
  $region12: #{rnn_language_model_forward.6} parent=0 // pred_region
    _
  $region13: #{rnn_language_model_forward.6} parent=0 // pred_fallthru
    _
  %p17 = scmp.eq.s32.totalorder 0, 0
  // Predicated region
  $region14: #{rnn_language_model_forward.6} parent=0 // pred_check
    %p18 = pneg %p17
  $region15: #{rnn_language_model_forward.6} parent=0 // pred_check_branch
    %20 = sbr.rel (%p18) target = $region17
  $region16: #{rnn_language_model_forward.6} parent=0 // pred_region
    %v21 = vld [vmem:[%s1] sm:$0xff]
    %22 = vst [vmem:[#allocation2] sm:$0xff] %v21
  $region17: #{rnn_language_model_forward.6} parent=0 // pred_fallthru
    _
  %v23 = vld [vmem:[%s2] sm:$0xf]
  %v24 = vld [vmem:[%s2 + $0x4] sm:$0xf]
  %v25 = vld [vmem:[%s2 + $0x8] sm:$0xf]
  %v26 = vld [vmem:[%s2 + $0xc] sm:$0xf]
  %v27 = vld [vmem:[%s2 + $0x10] sm:$0xf]
  %v28 = vld [vmem:[%s2 + $0x14] sm:$0xf]
  %v29 = vld [vmem:[%s2 + $0x18] sm:$0xf]
  %v30 = vld [vmem:[%s2 + $0x1c] sm:$0xf]
  %v31 = vld [vmem:[%s2 + $0x20] sm:$0xf]
  %v32 = vld [vmem:[%s2 + $0x24] sm:$0xf]
  %v33 = vld [vmem:[%s2 + $0x28] sm:$0xf]
  %v34 = vld [vmem:[%s2 + $0x2c] sm:$0xf]
  %v35 = vld [vmem:[%s2 + $0x30] sm:$0xf]
  %v36 = vld [vmem:[%s2 + $0x34] sm:$0xf]
  %v37 = vld [vmem:[%s2 + $0x38] sm:$0xf]
  %v38 = vld [vmem:[%s2 + $0x3c] sm:$0xf]
  %v39 = vld [vmem:[#allocation2] sm:$0xff]
  %v40 = vld [vmem:[%s0] sm:$0xff]
  %v41 = vpack.c.bf16 %v39, %v39
  %v58 = vunpack.c.l.b16 %v23
  %v59 = vunpack.c.l.b16 %v24
  %v60 = vunpack.c.l.b16 %v25
  %v61 = vunpack.c.l.b16 %v26
  %v62 = vunpack.c.l.b16 %v27
  %v63 = vunpack.c.l.b16 %v28
  %v64 = vunpack.c.l.b16 %v29
  %v65 = vunpack.c.l.b16 %v30
  %v66 = vunpack.c.l.b16 %v31
  %v67 = vunpack.c.l.b16 %v32
  %v68 = vunpack.c.l.b16 %v33
  %v69 = vunpack.c.l.b16 %v34
  %v70 = vunpack.c.l.b16 %v35
  %v71 = vunpack.c.l.b16 %v36
  %v72 = vunpack.c.l.b16 %v37
  %v73 = vunpack.c.l.b16 %v38
  %v74 = vpack.c.b16 %v59, %v58
  %v75 = vpack.c.b16 %v61, %v60
  %v76 = vpack.c.b16 %v63, %v62
  %v77 = vpack.c.b16 %v65, %v64
  %v78 = vpack.c.b16 %v67, %v66
  %v79 = vpack.c.b16 %v69, %v68
  %v80 = vpack.c.b16 %v71, %v70
  %v81 = vpack.c.b16 %v73, %v72
  %90 = vmatprep.subr.bf16.mxu0 0
  %91 = vmatpush1.bf16.msra.mxu0 %v81
  %92 = vmatprep.subr.bf16.mxu0 0
  %93 = vmatpush1.bf16.msra.mxu0 %v80
  %94 = vmatprep.subr.bf16.mxu0 0
  %95 = vmatpush1.bf16.msra.mxu0 %v79
  %96 = vmatprep.subr.bf16.mxu0 0
  %97 = vmatpush1.bf16.msra.mxu0 %v78
  %98 = vmatprep.subr.bf16.mxu0 0
  %99 = vmatpush1.bf16.msra.mxu0 %v77
  %100 = vmatprep.subr.bf16.mxu0 0
  %101 = vmatpush1.bf16.msra.mxu0 %v76
  %102 = vmatprep.subr.bf16.mxu0 0
  %103 = vmatpush1.bf16.msra.mxu0 %v75
  %104 = vmatprep.subr.bf16.mxu0 0
  %105 = vmatpush1.bf16.msra.mxu0 %v74
  %106 = vmatprep.subr.bf16.mxu0 0
  %107 = vmatpush2.bf16.msra.mxu0 0
  %108 = vmatprep.subr.bf16.mxu0 0
  %109 = vmatpush2.bf16.msra.mxu0 0
  %110 = vmatprep.subr.bf16.mxu0 0
  %111 = vmatpush2.bf16.msra.mxu0 0
  %112 = vmatprep.subr.bf16.mxu0 0
  %113 = vmatpush2.bf16.msra.mxu0 0
  %114 = vmatprep.subr.bf16.mxu0 0
  %115 = vmatpush2.bf16.msra.mxu0 0
  %116 = vmatprep.subr.bf16.mxu0 0
  %117 = vmatpush2.bf16.msra.mxu0 0
  %118 = vmatprep.subr.bf16.mxu0 0
  %119 = vmatpush2.bf16.msra.mxu0 0
  %120 = vmatprep.subr.bf16.mxu0 0
  %121 = vmatpush2.bf16.msra.mxu0 0
  %122 = vmatprep.mubr.bf16.mxu0 0
  %123 = vmatmul.mubr.bf16.gmra.mxu0 %v41
  %v124 = vpop.f32.mrf.mxu0
  %v125 = vadd.f32 0.0, %v124
  %v126 = vpop.f32.mrf.mxu0
  %v127 = vpop.f32.mrf.mxu0
  %v128 = vpop.f32.mrf.mxu0
  %129 = vdwg.mxu0
  %v130 = vadd.f32 %v40, %v125
  %v131 = vtanh.pop %v130
  %v132 = vpack.c.bf16 %v131, %v131
  %133 = vst [vmem:[%s3] sm:$0xf] %v132
  %s134 = scalar_lea.vmem %s0, 8
  %v135 = vld [vmem:[%s134] sm:$0xff]
  %136 = vmatprep.subr.bf16.mxu0 0
  %137 = vmatpush1.bf16.msra.mxu0 %v81
  %138 = vmatprep.subr.bf16.mxu0 0
  %139 = vmatpush1.bf16.msra.mxu0 %v80
  %140 = vmatprep.subr.bf16.mxu0 0
  %141 = vmatpush1.bf16.msra.mxu0 %v79
  %142 = vmatprep.subr.bf16.mxu0 0
  %143 = vmatpush1.bf16.msra.mxu0 %v78
  %144 = vmatprep.subr.bf16.mxu0 0
  %145 = vmatpush1.bf16.msra.mxu0 %v77
  %146 = vmatprep.subr.bf16.mxu0 0
  %147 = vmatpush1.bf16.msra.mxu0 %v76
  %148 = vmatprep.subr.bf16.mxu0 0
  %149 = vmatpush1.bf16.msra.mxu0 %v75
  %150 = vmatprep.subr.bf16.mxu0 0
  %151 = vmatpush1.bf16.msra.mxu0 %v74
  %152 = vmatprep.subr.bf16.mxu0 0
  %153 = vmatpush2.bf16.msra.mxu0 0
  %154 = vmatprep.subr.bf16.mxu0 0
  %155 = vmatpush2.bf16.msra.mxu0 0
  %156 = vmatprep.subr.bf16.mxu0 0
  %157 = vmatpush2.bf16.msra.mxu0 0
  %158 = vmatprep.subr.bf16.mxu0 0
  %159 = vmatpush2.bf16.msra.mxu0 0
  %160 = vmatprep.subr.bf16.mxu0 0
  %161 = vmatpush2.bf16.msra.mxu0 0
  %162 = vmatprep.subr.bf16.mxu0 0
  %163 = vmatpush2.bf16.msra.mxu0 0
  %164 = vmatprep.subr.bf16.mxu0 0
  %165 = vmatpush2.bf16.msra.mxu0 0
  %166 = vmatprep.subr.bf16.mxu0 0
  %167 = vmatpush2.bf16.msra.mxu0 0
  %168 = vmatprep.mubr.bf16.mxu0 0
  %169 = vmatmul.mubr.bf16.gmra.mxu0 %v132
  %v170 = vpop.f32.mrf.mxu0
  %v171 = vadd.f32 0.0, %v170
  %v172 = vpop.f32.mrf.mxu0
  %v173 = vpop.f32.mrf.mxu0
  %v174 = vpop.f32.mrf.mxu0
  %175 = vdwg.mxu0
  %v176 = vadd.f32 %v135, %v171
  %v177 = vtanh.pop %v176
  %v178 = vpack.c.bf16 %v177, %v177
  %s179 = scalar_lea.vmem %s3, 4
  %180 = vst [vmem:[%s179] sm:$0xf] %v178
  %s181 = scalar_lea.vmem %s0, 16
  %v182 = vld [vmem:[%s181] sm:$0xff]
  %183 = vmatprep.subr.bf16.mxu0 0
  %184 = vmatpush1.bf16.msra.mxu0 %v81
  %185 = vmatprep.subr.bf16.mxu0 0
  %186 = vmatpush1.bf16.msra.mxu0 %v80
  %187 = vmatprep.subr.bf16.mxu0 0
  %188 = vmatpush1.bf16.msra.mxu0 %v79
  %189 = vmatprep.subr.bf16.mxu0 0
  %190 = vmatpush1.bf16.msra.mxu0 %v78
  %191 = vmatprep.subr.bf16.mxu0 0
  %192 = vmatpush1.bf16.msra.mxu0 %v77
  %193 = vmatprep.subr.bf16.mxu0 0
  %194 = vmatpush1.bf16.msra.mxu0 %v76
  %195 = vmatprep.subr.bf16.mxu0 0
  %196 = vmatpush1.bf16.msra.mxu0 %v75
  %197 = vmatprep.subr.bf16.mxu0 0
  %198 = vmatpush1.bf16.msra.mxu0 %v74
  %199 = vmatprep.subr.bf16.mxu0 0
  %200 = vmatpush2.bf16.msra.mxu0 0
  %201 = vmatprep.subr.bf16.mxu0 0
  %202 = vmatpush2.bf16.msra.mxu0 0
  %203 = vmatprep.subr.bf16.mxu0 0
  %204 = vmatpush2.bf16.msra.mxu0 0
  %205 = vmatprep.subr.bf16.mxu0 0
  %206 = vmatpush2.bf16.msra.mxu0 0
  %207 = vmatprep.subr.bf16.mxu0 0
  %208 = vmatpush2.bf16.msra.mxu0 0
  %209 = vmatprep.subr.bf16.mxu0 0
  %210 = vmatpush2.bf16.msra.mxu0 0
  %211 = vmatprep.subr.bf16.mxu0 0
  %212 = vmatpush2.bf16.msra.mxu0 0
  %213 = vmatprep.subr.bf16.mxu0 0
  %214 = vmatpush2.bf16.msra.mxu0 0
  %215 = vmatprep.mubr.bf16.mxu0 0
  %216 = vmatmul.mubr.bf16.gmra.mxu0 %v178
  %v217 = vpop.f32.mrf.mxu0
  %v218 = vadd.f32 0.0, %v217
  %v219 = vpop.f32.mrf.mxu0
  %v220 = vpop.f32.mrf.mxu0
  %v221 = vpop.f32.mrf.mxu0
  %222 = vdwg.mxu0
  %v223 = vadd.f32 %v182, %v218
  %v224 = vtanh.pop %v223
  %v225 = vpack.c.bf16 %v224, %v224
  %s226 = scalar_lea.vmem %s3, 8
  %227 = vst [vmem:[%s226] sm:$0xf] %v225
  %s228 = scalar_lea.vmem %s0, 24
  %v229 = vld [vmem:[%s228] sm:$0xff]
  %230 = vmatprep.subr.bf16.mxu0 0
  %231 = vmatpush1.bf16.msra.mxu0 %v81
  %232 = vmatprep.subr.bf16.mxu0 0
  %233 = vmatpush1.bf16.msra.mxu0 %v80
  %234 = vmatprep.subr.bf16.mxu0 0
  %235 = vmatpush1.bf16.msra.mxu0 %v79
  %236 = vmatprep.subr.bf16.mxu0 0
  %237 = vmatpush1.bf16.msra.mxu0 %v78
  %238 = vmatprep.subr.bf16.mxu0 0
  %239 = vmatpush1.bf16.msra.mxu0 %v77
  %240 = vmatprep.subr.bf16.mxu0 0
  %241 = vmatpush1.bf16.msra.mxu0 %v76
  %242 = vmatprep.subr.bf16.mxu0 0
  %243 = vmatpush1.bf16.msra.mxu0 %v75
  %244 = vmatprep.subr.bf16.mxu0 0
  %245 = vmatpush1.bf16.msra.mxu0 %v74
  %246 = vmatprep.subr.bf16.mxu0 0
  %247 = vmatpush2.bf16.msra.mxu0 0
  %248 = vmatprep.subr.bf16.mxu0 0
  %249 = vmatpush2.bf16.msra.mxu0 0
  %250 = vmatprep.subr.bf16.mxu0 0
  %251 = vmatpush2.bf16.msra.mxu0 0
  %252 = vmatprep.subr.bf16.mxu0 0
  %253 = vmatpush2.bf16.msra.mxu0 0
  %254 = vmatprep.subr.bf16.mxu0 0
  %255 = vmatpush2.bf16.msra.mxu0 0
  %256 = vmatprep.subr.bf16.mxu0 0
  %257 = vmatpush2.bf16.msra.mxu0 0
  %258 = vmatprep.subr.bf16.mxu0 0
  %259 = vmatpush2.bf16.msra.mxu0 0
  %260 = vmatprep.subr.bf16.mxu0 0
  %261 = vmatpush2.bf16.msra.mxu0 0
  %262 = vmatprep.mubr.bf16.mxu0 0
  %263 = vmatmul.mubr.bf16.gmra.mxu0 %v225
  %v264 = vpop.f32.mrf.mxu0
  %v265 = vadd.f32 0.0, %v264
  %v266 = vpop.f32.mrf.mxu0
  %v267 = vpop.f32.mrf.mxu0
  %v268 = vpop.f32.mrf.mxu0
  %269 = vdwg.mxu0
  %v270 = vadd.f32 %v229, %v265
  %v271 = vtanh.pop %v270
  %v272 = vpack.c.bf16 %v271, %v271
  %s273 = scalar_lea.vmem %s3, 12
  %274 = vst [vmem:[%s273] sm:$0xf] %v272
  %s275 = scalar_lea.vmem %s0, 32
  %v276 = vld [vmem:[%s275] sm:$0xff]
  %277 = vmatprep.subr.bf16.mxu0 0
  %278 = vmatpush1.bf16.msra.mxu0 %v81
  %279 = vmatprep.subr.bf16.mxu0 0
  %280 = vmatpush1.bf16.msra.mxu0 %v80
  %281 = vmatprep.subr.bf16.mxu0 0
  %282 = vmatpush1.bf16.msra.mxu0 %v79
  %283 = vmatprep.subr.bf16.mxu0 0
  %284 = vmatpush1.bf16.msra.mxu0 %v78
  %285 = vmatprep.subr.bf16.mxu0 0
  %286 = vmatpush1.bf16.msra.mxu0 %v77
  %287 = vmatprep.subr.bf16.mxu0 0
  %288 = vmatpush1.bf16.msra.mxu0 %v76
  %289 = vmatprep.subr.bf16.mxu0 0
  %290 = vmatpush1.bf16.msra.mxu0 %v75
  %291 = vmatprep.subr.bf16.mxu0 0
  %292 = vmatpush1.bf16.msra.mxu0 %v74
  %293 = vmatprep.subr.bf16.mxu0 0
  %294 = vmatpush2.bf16.msra.mxu0 0
  %295 = vmatprep.subr.bf16.mxu0 0
  %296 = vmatpush2.bf16.msra.mxu0 0
  %297 = vmatprep.subr.bf16.mxu0 0
  %298 = vmatpush2.bf16.msra.mxu0 0
  %299 = vmatprep.subr.bf16.mxu0 0
  %300 = vmatpush2.bf16.msra.mxu0 0
  %301 = vmatprep.subr.bf16.mxu0 0
  %302 = vmatpush2.bf16.msra.mxu0 0
  %303 = vmatprep.subr.bf16.mxu0 0
  %304 = vmatpush2.bf16.msra.mxu0 0
  %305 = vmatprep.subr.bf16.mxu0 0
  %306 = vmatpush2.bf16.msra.mxu0 0
  %307 = vmatprep.subr.bf16.mxu0 0
  %308 = vmatpush2.bf16.msra.mxu0 0
  %309 = vmatprep.mubr.bf16.mxu0 0
  %310 = vmatmul.mubr.bf16.gmra.mxu0 %v272
  %v311 = vpop.f32.mrf.mxu0
  %v312 = vadd.f32 0.0, %v311
  %v313 = vpop.f32.mrf.mxu0
  %v314 = vpop.f32.mrf.mxu0
  %v315 = vpop.f32.mrf.mxu0
  %316 = vdwg.mxu0
  %v317 = vadd.f32 %v276, %v312
  %v318 = vtanh.pop %v317
  %v319 = vpack.c.bf16 %v318, %v318
  %s320 = scalar_lea.vmem %s3, 16
  %321 = vst [vmem:[%s320] sm:$0xf] %v319
  %s322 = scalar_lea.vmem %s0, 40
  %v323 = vld [vmem:[%s322] sm:$0xff]
  %324 = vmatprep.subr.bf16.mxu0 0
  %325 = vmatpush1.bf16.msra.mxu0 %v81
  %326 = vmatprep.subr.bf16.mxu0 0
  %327 = vmatpush1.bf16.msra.mxu0 %v80
  %328 = vmatprep.subr.bf16.mxu0 0
  %329 = vmatpush1.bf16.msra.mxu0 %v79
  %330 = vmatprep.subr.bf16.mxu0 0
  %331 = vmatpush1.bf16.msra.mxu0 %v78
  %332 = vmatprep.subr.bf16.mxu0 0
  %333 = vmatpush1.bf16.msra.mxu0 %v77
  %334 = vmatprep.subr.bf16.mxu0 0
  %335 = vmatpush1.bf16.msra.mxu0 %v76
  %336 = vmatprep.subr.bf16.mxu0 0
  %337 = vmatpush1.bf16.msra.mxu0 %v75
  %338 = vmatprep.subr.bf16.mxu0 0
  %339 = vmatpush1.bf16.msra.mxu0 %v74
  %340 = vmatprep.subr.bf16.mxu0 0
  %341 = vmatpush2.bf16.msra.mxu0 0
  %342 = vmatprep.subr.bf16.mxu0 0
  %343 = vmatpush2.bf16.msra.mxu0 0
  %344 = vmatprep.subr.bf16.mxu0 0
  %345 = vmatpush2.bf16.msra.mxu0 0
  %346 = vmatprep.subr.bf16.mxu0 0
  %347 = vmatpush2.bf16.msra.mxu0 0
  %348 = vmatprep.subr.bf16.mxu0 0
  %349 = vmatpush2.bf16.msra.mxu0 0
  %350 = vmatprep.subr.bf16.mxu0 0
  %351 = vmatpush2.bf16.msra.mxu0 0
  %352 = vmatprep.subr.bf16.mxu0 0
  %353 = vmatpush2.bf16.msra.mxu0 0
  %354 = vmatprep.subr.bf16.mxu0 0
  %355 = vmatpush2.bf16.msra.mxu0 0
  %356 = vmatprep.mubr.bf16.mxu0 0
  %357 = vmatmul.mubr.bf16.gmra.mxu0 %v319
  %v358 = vpop.f32.mrf.mxu0
  %v359 = vadd.f32 0.0, %v358
  %v360 = vpop.f32.mrf.mxu0
  %v361 = vpop.f32.mrf.mxu0
  %v362 = vpop.f32.mrf.mxu0
  %363 = vdwg.mxu0
  %v364 = vadd.f32 %v323, %v359
  %v365 = vtanh.pop %v364
  %v366 = vpack.c.bf16 %v365, %v365
  %s367 = scalar_lea.vmem %s3, 20
  %368 = vst [vmem:[%s367] sm:$0xf] %v366
  %s369 = scalar_lea.vmem %s0, 48
  %v370 = vld [vmem:[%s369] sm:$0xff]
  %371 = vmatprep.subr.bf16.mxu0 0
  %372 = vmatpush1.bf16.msra.mxu0 %v81
  %373 = vmatprep.subr.bf16.mxu0 0
  %374 = vmatpush1.bf16.msra.mxu0 %v80
  %375 = vmatprep.subr.bf16.mxu0 0
  %376 = vmatpush1.bf16.msra.mxu0 %v79
  %377 = vmatprep.subr.bf16.mxu0 0
  %378 = vmatpush1.bf16.msra.mxu0 %v78
  %379 = vmatprep.subr.bf16.mxu0 0
  %380 = vmatpush1.bf16.msra.mxu0 %v77
  %381 = vmatprep.subr.bf16.mxu0 0
  %382 = vmatpush1.bf16.msra.mxu0 %v76
  %383 = vmatprep.subr.bf16.mxu0 0
  %384 = vmatpush1.bf16.msra.mxu0 %v75
  %385 = vmatprep.subr.bf16.mxu0 0
  %386 = vmatpush1.bf16.msra.mxu0 %v74
  %387 = vmatprep.subr.bf16.mxu0 0
  %388 = vmatpush2.bf16.msra.mxu0 0
  %389 = vmatprep.subr.bf16.mxu0 0
  %390 = vmatpush2.bf16.msra.mxu0 0
  %391 = vmatprep.subr.bf16.mxu0 0
  %392 = vmatpush2.bf16.msra.mxu0 0
  %393 = vmatprep.subr.bf16.mxu0 0
  %394 = vmatpush2.bf16.msra.mxu0 0
  %395 = vmatprep.subr.bf16.mxu0 0
  %396 = vmatpush2.bf16.msra.mxu0 0
  %397 = vmatprep.subr.bf16.mxu0 0
  %398 = vmatpush2.bf16.msra.mxu0 0
  %399 = vmatprep.subr.bf16.mxu0 0
  %400 = vmatpush2.bf16.msra.mxu0 0
  %401 = vmatprep.subr.bf16.mxu0 0
  %402 = vmatpush2.bf16.msra.mxu0 0
  %403 = vmatprep.mubr.bf16.mxu0 0
  %404 = vmatmul.mubr.bf16.gmra.mxu0 %v366
  %v405 = vpop.f32.mrf.mxu0
  %v406 = vadd.f32 0.0, %v405
  %v407 = vpop.f32.mrf.mxu0
  %v408 = vpop.f32.mrf.mxu0
  %v409 = vpop.f32.mrf.mxu0
  %410 = vdwg.mxu0
  %v411 = vadd.f32 %v370, %v406
  %v412 = vtanh.pop %v411
  %v413 = vpack.c.bf16 %v412, %v412
  %s414 = scalar_lea.vmem %s3, 24
  %415 = vst [vmem:[%s414] sm:$0xf] %v413
  %s416 = scalar_lea.vmem %s0, 56
  %v417 = vld [vmem:[%s416] sm:$0xff]
  %418 = vmatprep.subr.bf16.mxu0 0
  %419 = vmatpush1.bf16.msra.mxu0 %v81
  %420 = vmatprep.subr.bf16.mxu0 0
  %421 = vmatpush1.bf16.msra.mxu0 %v80
  %422 = vmatprep.subr.bf16.mxu0 0
  %423 = vmatpush1.bf16.msra.mxu0 %v79
  %424 = vmatprep.subr.bf16.mxu0 0
  %425 = vmatpush1.bf16.msra.mxu0 %v78
  %426 = vmatprep.subr.bf16.mxu0 0
  %427 = vmatpush1.bf16.msra.mxu0 %v77
  %428 = vmatprep.subr.bf16.mxu0 0
  %429 = vmatpush1.bf16.msra.mxu0 %v76
  %430 = vmatprep.subr.bf16.mxu0 0
  %431 = vmatpush1.bf16.msra.mxu0 %v75
  %432 = vmatprep.subr.bf16.mxu0 0
  %433 = vmatpush1.bf16.msra.mxu0 %v74
  %434 = vmatprep.subr.bf16.mxu0 0
  %435 = vmatpush2.bf16.msra.mxu0 0
  %436 = vmatprep.subr.bf16.mxu0 0
  %437 = vmatpush2.bf16.msra.mxu0 0
  %438 = vmatprep.subr.bf16.mxu0 0
  %439 = vmatpush2.bf16.msra.mxu0 0
  %440 = vmatprep.subr.bf16.mxu0 0
  %441 = vmatpush2.bf16.msra.mxu0 0
  %442 = vmatprep.subr.bf16.mxu0 0
  %443 = vmatpush2.bf16.msra.mxu0 0
  %444 = vmatprep.subr.bf16.mxu0 0
  %445 = vmatpush2.bf16.msra.mxu0 0
  %446 = vmatprep.subr.bf16.mxu0 0
  %447 = vmatpush2.bf16.msra.mxu0 0
  %448 = vmatprep.subr.bf16.mxu0 0
  %449 = vmatpush2.bf16.msra.mxu0 0
  %450 = vmatprep.mubr.bf16.mxu0 0
  %451 = vmatmul.mubr.bf16.gmra.mxu0 %v413
  %v452 = vpop.f32.mrf.mxu0
  %v453 = vadd.f32 0.0, %v452
  %v454 = vpop.f32.mrf.mxu0
  %v455 = vpop.f32.mrf.mxu0
  %v456 = vpop.f32.mrf.mxu0
  %457 = vdwg.mxu0
  %v458 = vadd.f32 %v417, %v453
  %v459 = vtanh.pop %v458
  %v460 = vpack.c.bf16 %v459, %v459
  %s461 = scalar_lea.vmem %s3, 28
  %462 = vst [vmem:[%s461] sm:$0xf] %v460
  %463 = vst [vmem:[#allocation2] sm:$0xff] %v459
  // Predicated region
  $region18: #{rnn_language_model_forward.6} parent=0 // pred_check
    %p464 = pneg %p17
  $region19: #{rnn_language_model_forward.6} parent=0 // pred_check_branch
    %466 = sbr.rel (%p464) target = $region21
  $region20: #{rnn_language_model_forward.6} parent=0 // pred_region
    %467 = vst [vmem:[%s4] sm:$0xff] %v459
  $region21: #{rnn_language_model_forward.6} parent=0 // pred_fallthru
    _
  // Predicated region
  $region22: #{rnn_language_model_forward.6} parent=0 // pred_check
    _
  $region23: #{rnn_language_model_forward.6} parent=0 // pred_check_branch
    %469 = sbr.rel (0) target = $region25
  $region24: #{rnn_language_model_forward.6} parent=0 // pred_region
    _
  $region25: #{rnn_language_model_forward.6} parent=0 // pred_fallthru
    _
  // Predicated region
  $region26: #{rnn_language_model_forward.6} parent=0 // pred_check
    _
  $region27: #{rnn_language_model_forward.6} parent=0 // pred_check_branch
    %471 = sbr.rel (0) target = $region29
  $region28: #{rnn_language_model_forward.6} parent=0 // pred_region
    _
  $region29: #{rnn_language_model_forward.6} parent=0 // pred_fallthru
    _
  // Predicated region
  $region30: #{rnn_language_model_forward.6} parent=0 // pred_check
    _
  $region31: #{rnn_language_model_forward.6} parent=0 // pred_check_branch
    %473 = sbr.rel (0) target = $region33
  $region32: #{rnn_language_model_forward.6} parent=0 // pred_region
    _
  $region33: #{rnn_language_model_forward.6} parent=0 // pred_fallthru
    _
  // Predicated region
  $region34: #{rnn_language_model_forward.6} parent=0 // pred_check
    _
  $region35: #{rnn_language_model_forward.6} parent=0 // pred_check_branch
    %475 = sbr.rel (0) target = $region37
  $region36: #{rnn_language_model_forward.6} parent=0 // pred_region
    _
  $region37: #{rnn_language_model_forward.6} parent=0 // pred_fallthru
    _

</llo_original>
